<compile_context>
chip_gen: v5e
topology: v5e:2x2
jax: 0.10.0
libtpu: 0.0.40
codegen_flags: <defaults>
</compile_context>

<pallas_src>
import math

import jax
import jax.numpy as jnp
from jax.experimental import pallas as pl
from jax.experimental.pallas import tpu as pltpu


# -----------------------------------------------------------------------------
# Model configuration (small, consistent with the module's forward)
# -----------------------------------------------------------------------------
DIM = 32                 # embedding dim
NUM_HEADS = 4            # heads
HEAD_DIM = DIM // NUM_HEADS
NUM_LAYERS = 2
MLP_MULT = 4             # hidden_layer_multiplier
DIM_MLP = MLP_MULT * DIM     # 128
SEQ = 8                  # tokens
BATCH = 2
TOKENS = BATCH * SEQ
BH = BATCH * NUM_HEADS   # fused batch*head axis used by the attention einsums
LN_EPS = 1e-5            # torch.nn.LayerNorm default
ATTN_SCALE = HEAD_DIM ** -0.5
_INV_SQRT2 = 1.0 / math.sqrt(2.0)

# Rows of the packed "small vectors" array (one (8, 128) slab per layer).
ROW_LN1_W, ROW_LN1_B, ROW_PROJ_B, ROW_LN2_W, ROW_LN2_B, ROW_FC2_B, ROW_FC1_B = range(7)
VEC_ROWS = 8
VEC_LANES = 128


def _layernorm(v, w, b):
    mu = jnp.mean(v, axis=-1, keepdims=True)
    var = jnp.mean((v - mu) ** 2, axis=-1, keepdims=True)
    return (v - mu) * jax.lax.rsqrt(var + LN_EPS) * w + b


def _gelu_exact(x):
    # torch nn.GELU default (approximate='none'): 0.5 * x * (1 + erf(x/sqrt(2)))
    return 0.5 * x * (1.0 + jax.lax.erf(x * _INV_SQRT2))


# -----------------------------------------------------------------------------
# Single fused kernel: all NUM_LAYERS AttentionBlocks, all batch elements.
# Grid = (1,) -- one program; everything lives in VMEM / vregs.
# (On v7x the second TensorCore is intentionally left idle: at B*N=16 the
# per-grid-step overhead would dominate; switch to a parallel batch grid only
# when batch/seq grow.)
# -----------------------------------------------------------------------------
def transformer_kernel(x_ref, vec_ref, wqkv_ref, wp_ref, w1_ref, w2_ref, out_ref):
    x = x_ref[...].astype(jnp.float32)                         # (B*N, D)

    for l in range(NUM_LAYERS):                                # static unroll
        vec = vec_ref[l]                                       # (8, 128)

        def row(r, width):
            return vec[r:r + 1, :width]                        # (1, width)

        ln1_w, ln1_b = row(ROW_LN1_W, DIM), row(ROW_LN1_B, DIM)
        ln2_w, ln2_b = row(ROW_LN2_W, DIM), row(ROW_LN2_B, DIM)
        proj_b = row(ROW_PROJ_B, DIM)
        fc1_b = row(ROW_FC1_B, DIM_MLP)
        fc2_b = row(ROW_FC2_B, DIM)

        # ---- x = x + attention(ln1(x)) ----
        h = _layernorm(x, ln1_w, ln1_b)                        # (B*N, D)
        h3 = h.reshape(BATCH, SEQ, DIM)                        # sublane-group split
        # one broadcast per layer (was one per layer per batch element):
        hx = jnp.broadcast_to(h3[:, None, :, :],
                              (BATCH, NUM_HEADS, SEQ, DIM)).reshape(BH, SEQ, DIM)

        # fused per-head [Q|K|V] projection: ONE batched matmul per layer
        # (Q weights pre-scaled by ATTN_SCALE in pack_params).
        qkv = jnp.einsum("xnd,xdf->xnf", hx, wqkv_ref[l],
                         preferred_element_type=jnp.float32)   # (BH, N, 3*hd)
        q = qkv[:, :, 0 * HEAD_DIM:1 * HEAD_DIM]               # (BH, N, hd)
        k = qkv[:, :, 1 * HEAD_DIM:2 * HEAD_DIM]
        v = qkv[:, :, 2 * HEAD_DIM:3 * HEAD_DIM]

        s = jnp.einsum("xqe,xke->xqk", q, k,
                       preferred_element_type=jnp.float32)     # (BH, N, N)
        s = s - jnp.max(s, axis=-1, keepdims=True)
        p = jnp.exp(s)
        p = p / jnp.sum(p, axis=-1, keepdims=True)             # exact softmax
        o = jnp.einsum("xqk,xke->xqe", p, v,
                       preferred_element_type=jnp.float32)     # (BH, N, hd)

        # per-head output projection + head reduction: one batched einsum
        # followed by a leading-axis sum (no per-head loop, no concat).
        pr = jnp.einsum("xne,xed->xnd", o, wp_ref[l],
                        preferred_element_type=jnp.float32)    # (BH, N, D)
        attn = jnp.sum(pr.reshape(BATCH, NUM_HEADS, SEQ, DIM), axis=1)  # (B, N, D)
        x = x + attn.reshape(TOKENS, DIM) + proj_b

        # ---- x = x + mlp(ln2(x)) ----
        h2 = _layernorm(x, ln2_w, ln2_b)
        h2 = jnp.dot(h2, w1_ref[l], preferred_element_type=jnp.float32) + fc1_b
        h2 = _gelu_exact(h2)
        h2 = jnp.dot(h2, w2_ref[l], preferred_element_type=jnp.float32) + fc2_b
        x = x + h2

    out_ref[...] = x.astype(out_ref.dtype)


def _full_spec(shape):
    # Whole array in VMEM, same block every grid step (grid has one step).
    return pl.BlockSpec(shape, lambda i: (0,) * len(shape))


@jax.jit
def transformer_forward(x, packed):
    """Transformer.forward (eval mode, dropout=0): all blocks in one kernel."""
    B, N, D = x.shape
    x2 = x.reshape(B * N, D)
    args = (x2,) + tuple(packed)
    out = pl.pallas_call(
        transformer_kernel,
        out_shape=jax.ShapeDtypeStruct((B * N, D), x.dtype),
        grid_spec=pltpu.PrefetchScalarGridSpec(
            num_scalar_prefetch=0,
            grid=(1,),
            in_specs=[_full_spec(a.shape) for a in args],
            out_specs=_full_spec((B * N, D)),
        ),
        compiler_params=pltpu.CompilerParams(
            dimension_semantics=("arbitrary",)),
    )(*args)
    return out.reshape(B, N, D)


# -----------------------------------------------------------------------------
# Deterministic parameter construction (synthetic init, no checkpoint load)
# -----------------------------------------------------------------------------
def init_block_params(key):
    ks = jax.random.split(key, 7)
    scale = 0.02
    ln1_w = jnp.ones((DIM,), jnp.float32)
    ln1_b = jnp.zeros((DIM,), jnp.float32)
    # qkv_bias=False (Transformer default) -> no qkv bias term
    qkv_w = scale * jax.random.normal(ks[0], (DIM, 3 * DIM), jnp.float32)
    proj_w = scale * jax.random.normal(ks[1], (DIM, DIM), jnp.float32)
    proj_b = scale * jax.random.normal(ks[2], (DIM,), jnp.float32)
    ln2_w = jnp.ones((DIM,), jnp.float32)
    ln2_b = jnp.zeros((DIM,), jnp.float32)
    fc1_w = scale * jax.random.normal(ks[3], (DIM, DIM_MLP), jnp.float32)
    fc1_b = scale * jax.random.normal(ks[4], (DIM_MLP,), jnp.float32)
    fc2_w = scale * jax.random.normal(ks[5], (DIM_MLP, DIM), jnp.float32)
    fc2_b = scale * jax.random.normal(ks[6], (DIM,), jnp.float32)
    return (ln1_w, ln1_b, qkv_w, proj_w, proj_b,
            ln2_w, ln2_b, fc1_w, fc1_b, fc2_w, fc2_b)


def pack_params(layer_params):
    """Stack per-layer params into a handful of kernel-friendly arrays."""
    vecs, wqkv_t, wp_t, w1s, w2s = [], [], [], [], []
    for p in layer_params:
        (ln1_w, ln1_b, qkv_w, proj_w, proj_b,
         ln2_w, ln2_b, fc1_w, fc1_b, fc2_w, fc2_b) = p

        # Pack all small vectors (LN scales/biases, linear biases) into one
        # (8, 128) lane-padded slab -> single DMA instead of eight.
        v = jnp.zeros((VEC_ROWS, VEC_LANES), jnp.float32)
        v = v.at[ROW_LN1_W, :DIM].set(ln1_w)
        v = v.at[ROW_LN1_B, :DIM].set(ln1_b)
        v = v.at[ROW_PROJ_B, :DIM].set(proj_b)
        v = v.at[ROW_LN2_W, :DIM].set(ln2_w)
        v = v.at[ROW_LN2_B, :DIM].set(ln2_b)
        v = v.at[ROW_FC2_B, :DIM].set(fc2_b)
        v = v.at[ROW_FC1_B, :DIM_MLP].set(fc1_b)
        vecs.append(v)

        # Per-head fused [Q|K|V] weight slabs (D, 3*hd), ATTN_SCALE folded
        # into the Q columns, tiled over the batch so the kernel's attention
        # batch axis is B*H (b-major, h-minor).
        wq = qkv_w[:, 0 * DIM:1 * DIM].reshape(DIM, NUM_HEADS, HEAD_DIM) * ATTN_SCALE
        wk = qkv_w[:, 1 * DIM:2 * DIM].reshape(DIM, NUM_HEADS, HEAD_DIM)
        wv = qkv_w[:, 2 * DIM:3 * DIM].reshape(DIM, NUM_HEADS, HEAD_DIM)
        w_heads = jnp.concatenate([wq, wk, wv], axis=-1)        # (D, H, 3*hd)
        w_heads = jnp.transpose(w_heads, (1, 0, 2))             # (H, D, 3*hd)
        wqkv_t.append(jnp.tile(w_heads, (BATCH, 1, 1)))         # (B*H, D, 3*hd)

        # Output projection head blocks (hd, D), tiled over batch.
        wp_heads = proj_w.reshape(NUM_HEADS, HEAD_DIM, DIM)     # (H, hd, D)
        wp_t.append(jnp.tile(wp_heads, (BATCH, 1, 1)))          # (B*H, hd, D)

        w1s.append(fc1_w)
        w2s.append(fc2_w)

    stack = lambda xs: jnp.stack(xs, axis=0)
    return (stack(vecs), stack(wqkv_t), stack(wp_t), stack(w1s), stack(w2s))


# -----------------------------------------------------------------------------
# Pure-JAX reference for a sanity check
# -----------------------------------------------------------------------------
def _ref_block(x, params):
    (ln1_w, ln1_b, qkv_w, proj_w, proj_b,
     ln2_w, ln2_b, fc1_w, fc1_b, fc2_w, fc2_b) = params
    B, N, D = x.shape

    def ln(v, w, b):
        mu = jnp.mean(v, -1, keepdims=True)
        var = jnp.mean((v - mu) ** 2, -1, keepdims=True)
        return (v - mu) / jnp.sqrt(var + LN_EPS) * w + b

    h = ln(x, ln1_w, ln1_b)
    qkv = h @ qkv_w
    q, k, v = jnp.split(qkv, 3, axis=-1)
    q = q.reshape(B, N, NUM_HEADS, HEAD_DIM).transpose(0, 2, 1, 3)
    k = k.reshape(B, N, NUM_HEADS, HEAD_DIM).transpose(0, 2, 1, 3)
    v = v.reshape(B, N, NUM_HEADS, HEAD_DIM).transpose(0, 2, 1, 3)
    s = jnp.einsum("bhqd,bhkd->bhqk", q, k) * ATTN_SCALE
    p = jax.nn.softmax(s, axis=-1)
    o = jnp.einsum("bhqk,bhkd->bhqd", p, v).transpose(0, 2, 1, 3).reshape(B, N, D)
    x = x + (o @ proj_w + proj_b)
    h2 = ln(x, ln2_w, ln2_b)
    h2 = h2 @ fc1_w + fc1_b
    h2 = 0.5 * h2 * (1.0 + jax.lax.erf(h2 / jnp.sqrt(2.0)))
    h2 = h2 @ fc2_w + fc2_b
    return x + h2


if __name__ == "__main__":
    key = jax.random.PRNGKey(0)
    k_x, *k_layers = jax.random.split(key, 1 + NUM_LAYERS)

    x = jax.random.normal(k_x, (BATCH, SEQ, DIM), jnp.float32)
    layer_params = [init_block_params(k) for k in k_layers]
    packed = pack_params(layer_params)

    out = transformer_forward(x, packed)
    out = jax.block_until_ready(out)

    # sanity check against pure-JAX reference
    ref = x
    for p in layer_params:
        ref = _ref_block(ref, p)
    assert out.shape == (BATCH, SEQ, DIM)
    max_err = float(jnp.max(jnp.abs(out - ref)))
    assert jnp.allclose(out, ref, atol=2e-3, rtol=2e-3), max_err

    print("KERNEL_OK")
</pallas_src>

<mosaic_0001>
module attributes {stable_mosaic.version = 11 : i64} {
  func.func @transformer_kernel(%arg0: i32, %arg1: memref<16x32xf32, #tpu.memory_space<vmem>>, %arg2: memref<2x8x128xf32, #tpu.memory_space<vmem>>, %arg3: memref<2x8x32x24xf32, #tpu.memory_space<vmem>>, %arg4: memref<2x8x8x32xf32, #tpu.memory_space<vmem>>, %arg5: memref<2x32x128xf32, #tpu.memory_space<vmem>>, %arg6: memref<2x128x32xf32, #tpu.memory_space<vmem>>, %arg7: memref<16x32xf32, #tpu.memory_space<vmem>>) attributes {dimension_semantics = [#tpu.dimension_semantics<arbitrary>], iteration_bounds = array<i64: 1>, scalar_prefetch = 0 : i64, scratch_operands = 0 : i64, tpu.core_type = #tpu.core_type<tc>, window_params = [{pipeline_mode = #tpu.pipeline_mode<synchronous>, transform_indices = @transform_0, window_bounds = array<i64: 16, 32>}, {pipeline_mode = #tpu.pipeline_mode<synchronous>, transform_indices = @transform_1, window_bounds = array<i64: 2, 8, 128>}, {pipeline_mode = #tpu.pipeline_mode<synchronous>, transform_indices = @transform_2, window_bounds = array<i64: 2, 8, 32, 24>}, {pipeline_mode = #tpu.pipeline_mode<synchronous>, transform_indices = @transform_3, window_bounds = array<i64: 2, 8, 8, 32>}, {pipeline_mode = #tpu.pipeline_mode<synchronous>, transform_indices = @transform_4, window_bounds = array<i64: 2, 32, 128>}, {pipeline_mode = #tpu.pipeline_mode<synchronous>, transform_indices = @transform_5, window_bounds = array<i64: 2, 128, 32>}, {pipeline_mode = #tpu.pipeline_mode<synchronous>, transform_indices = @transform_6, window_bounds = array<i64: 16, 32>}]} {
    %c0 = arith.constant 0 : index
    %c0_0 = arith.constant 0 : index
    %0 = vector.load %arg1[%c0, %c0_0] : memref<16x32xf32, #tpu.memory_space<vmem>>, vector<16x32xf32>
    %c0_1 = arith.constant 0 : index
    %c0_2 = arith.constant 0 : index
    %c0_3 = arith.constant 0 : index
    %1 = vector.load %arg2[%c0_1, %c0_2, %c0_3] : memref<2x8x128xf32, #tpu.memory_space<vmem>>, vector<1x8x128xf32>
    %2 = vector.shape_cast %1 : vector<1x8x128xf32> to vector<8x128xf32>
    %3 = vector.extract_strided_slice %2 {offsets = [0, 0], sizes = [1, 32], strides = [1, 1]} : vector<8x128xf32> to vector<1x32xf32>
    %4 = vector.extract_strided_slice %2 {offsets = [1, 0], sizes = [1, 32], strides = [1, 1]} : vector<8x128xf32> to vector<1x32xf32>
    %5 = vector.extract_strided_slice %2 {offsets = [3, 0], sizes = [1, 32], strides = [1, 1]} : vector<8x128xf32> to vector<1x32xf32>
    %6 = vector.extract_strided_slice %2 {offsets = [4, 0], sizes = [1, 32], strides = [1, 1]} : vector<8x128xf32> to vector<1x32xf32>
    %7 = vector.extract_strided_slice %2 {offsets = [2, 0], sizes = [1, 32], strides = [1, 1]} : vector<8x128xf32> to vector<1x32xf32>
    %8 = vector.extract_strided_slice %2 {offsets = [6, 0], sizes = [1, 128], strides = [1, 1]} : vector<8x128xf32> to vector<1x128xf32>
    %9 = vector.extract_strided_slice %2 {offsets = [5, 0], sizes = [1, 32], strides = [1, 1]} : vector<8x128xf32> to vector<1x32xf32>
    %cst = arith.constant dense<0.000000e+00> : vector<16xf32>
    %10 = vector.multi_reduction <add>, %0, %cst [1] : vector<16x32xf32> to vector<16xf32>
    %11 = vector.shape_cast %10 : vector<16xf32> to vector<16x1xf32>
    %cst_4 = arith.constant 3.200000e+01 : f32
    %12 = vector.broadcast %cst_4 : f32 to vector<16x1xf32>
    %13 = arith.divf %11, %12 : vector<16x1xf32>
    %14 = vector.broadcast %13 : vector<16x1xf32> to vector<16x32xf32>
    %15 = arith.subf %0, %14 : vector<16x32xf32>
    %16 = arith.mulf %15, %15 : vector<16x32xf32>
    %cst_5 = arith.constant dense<0.000000e+00> : vector<16xf32>
    %17 = vector.multi_reduction <add>, %16, %cst_5 [1] : vector<16x32xf32> to vector<16xf32>
    %18 = vector.shape_cast %17 : vector<16xf32> to vector<16x1xf32>
    %cst_6 = arith.constant 3.200000e+01 : f32
    %19 = vector.broadcast %cst_6 : f32 to vector<16x1xf32>
    %20 = arith.divf %18, %19 : vector<16x1xf32>
    %21 = vector.broadcast %13 : vector<16x1xf32> to vector<16x32xf32>
    %22 = arith.subf %0, %21 : vector<16x32xf32>
    %cst_7 = arith.constant 9.99999974E-6 : f32
    %23 = vector.broadcast %cst_7 : f32 to vector<16x1xf32>
    %24 = arith.addf %20, %23 : vector<16x1xf32>
    %25 = math.rsqrt %24 : vector<16x1xf32>
    %26 = vector.broadcast %25 : vector<16x1xf32> to vector<16x32xf32>
    %27 = arith.mulf %22, %26 : vector<16x32xf32>
    %28 = vector.broadcast %3 : vector<1x32xf32> to vector<16x32xf32>
    %29 = arith.mulf %27, %28 : vector<16x32xf32>
    %30 = vector.broadcast %4 : vector<1x32xf32> to vector<16x32xf32>
    %31 = arith.addf %29, %30 : vector<16x32xf32>
    %32 = vector.shape_cast %31 : vector<16x32xf32> to vector<2x8x32xf32>
    %33 = vector.shape_cast %32 : vector<2x8x32xf32> to vector<2x1x8x32xf32>
    %34 = vector.shape_cast %33 : vector<2x1x8x32xf32> to vector<2x1x8x32xf32>
    %35 = vector.broadcast %34 : vector<2x1x8x32xf32> to vector<2x4x8x32xf32>
    %36 = vector.shape_cast %35 : vector<2x4x8x32xf32> to vector<8x8x32xf32>
    %c0_8 = arith.constant 0 : index
    %c0_9 = arith.constant 0 : index
    %c0_10 = arith.constant 0 : index
    %c0_11 = arith.constant 0 : index
    %37 = vector.load %arg3[%c0_8, %c0_9, %c0_10, %c0_11] : memref<2x8x32x24xf32, #tpu.memory_space<vmem>>, vector<1x8x32x24xf32>
    %38 = vector.shape_cast %37 : vector<1x8x32x24xf32> to vector<8x32x24xf32>
    "tpu.trace_start"() <{level = 10 : i32, message = "xnd,xdf->xnf"}> : () -> ()
    %cst_12 = arith.constant dense<0.000000e+00> : vector<8x8x24xf32>
    %39 = tpu.matmul %36, %38, %cst_12 {dimension_numbers = #tpu.dot_dimension_numbers<[2], [1], [1], [2], [0, 0, 0, 1, 1, 2], [0], [0]>} : vector<8x8x32xf32>, vector<8x32x24xf32>, vector<8x8x24xf32> -> vector<8x8x24xf32>
    "tpu.trace_stop"() : () -> ()
    %40 = vector.extract_strided_slice %39 {offsets = [0, 0, 0], sizes = [8, 8, 8], strides = [1, 1, 1]} : vector<8x8x24xf32> to vector<8x8x8xf32>
    %41 = vector.extract_strided_slice %39 {offsets = [0, 0, 8], sizes = [8, 8, 8], strides = [1, 1, 1]} : vector<8x8x24xf32> to vector<8x8x8xf32>
    %42 = vector.extract_strided_slice %39 {offsets = [0, 0, 16], sizes = [8, 8, 8], strides = [1, 1, 1]} : vector<8x8x24xf32> to vector<8x8x8xf32>
    "tpu.trace_start"() <{level = 10 : i32, message = "xqe,xke->xqk"}> : () -> ()
    %cst_13 = arith.constant dense<0.000000e+00> : vector<8x8x8xf32>
    %43 = tpu.matmul %40, %41, %cst_13 {dimension_numbers = #tpu.dot_dimension_numbers<[2], [2], [1], [1], [0, 0, 0, 1, 1, 1], [0], [0]>} : vector<8x8x8xf32>, vector<8x8x8xf32>, vector<8x8x8xf32> -> vector<8x8x8xf32>
    "tpu.trace_stop"() : () -> ()
    %cst_14 = arith.constant dense<0xFF800000> : vector<8x8xf32>
    %44 = vector.multi_reduction <maximumf>, %43, %cst_14 [2] : vector<8x8x8xf32> to vector<8x8xf32>
    %45 = vector.shape_cast %44 : vector<8x8xf32> to vector<8x8x1xf32>
    %46 = vector.broadcast %45 : vector<8x8x1xf32> to vector<8x8x8xf32>
    %47 = arith.subf %43, %46 : vector<8x8x8xf32>
    %48 = math.exp %47 : vector<8x8x8xf32>
    %cst_15 = arith.constant dense<0.000000e+00> : vector<8x8xf32>
    %49 = vector.multi_reduction <add>, %48, %cst_15 [2] : vector<8x8x8xf32> to vector<8x8xf32>
    %50 = vector.shape_cast %49 : vector<8x8xf32> to vector<8x8x1xf32>
    %51 = vector.broadcast %50 : vector<8x8x1xf32> to vector<8x8x8xf32>
    %52 = arith.divf %48, %51 : vector<8x8x8xf32>
    "tpu.trace_start"() <{level = 10 : i32, message = "xqk,xke->xqe"}> : () -> ()
    %cst_16 = arith.constant dense<0.000000e+00> : vector<8x8x8xf32>
    %53 = tpu.matmul %52, %42, %cst_16 {dimension_numbers = #tpu.dot_dimension_numbers<[2], [1], [1], [2], [0, 0, 0, 1, 1, 2], [0], [0]>} : vector<8x8x8xf32>, vector<8x8x8xf32>, vector<8x8x8xf32> -> vector<8x8x8xf32>
    "tpu.trace_stop"() : () -> ()
    %c0_17 = arith.constant 0 : index
    %c0_18 = arith.constant 0 : index
    %c0_19 = arith.constant 0 : index
    %c0_20 = arith.constant 0 : index
    %54 = vector.load %arg4[%c0_17, %c0_18, %c0_19, %c0_20] : memref<2x8x8x32xf32, #tpu.memory_space<vmem>>, vector<1x8x8x32xf32>
    %55 = vector.shape_cast %54 : vector<1x8x8x32xf32> to vector<8x8x32xf32>
    "tpu.trace_start"() <{level = 10 : i32, message = "xne,xed->xnd"}> : () -> ()
    %cst_21 = arith.constant dense<0.000000e+00> : vector<8x8x32xf32>
    %56 = tpu.matmul %53, %55, %cst_21 {dimension_numbers = #tpu.dot_dimension_numbers<[2], [1], [1], [2], [0, 0, 0, 1, 1, 2], [0], [0]>} : vector<8x8x8xf32>, vector<8x8x32xf32>, vector<8x8x32xf32> -> vector<8x8x32xf32>
    "tpu.trace_stop"() : () -> ()
    %57 = vector.shape_cast %56 : vector<8x8x32xf32> to vector<2x4x8x32xf32>
    %cst_22 = arith.constant dense<0.000000e+00> : vector<2x8x32xf32>
    %58 = vector.multi_reduction <add>, %57, %cst_22 [1] : vector<2x4x8x32xf32> to vector<2x8x32xf32>
    %59 = vector.shape_cast %58 : vector<2x8x32xf32> to vector<16x32xf32>
    %60 = arith.addf %0, %59 : vector<16x32xf32>
    %61 = vector.broadcast %7 : vector<1x32xf32> to vector<16x32xf32>
    %62 = arith.addf %60, %61 : vector<16x32xf32>
    %cst_23 = arith.constant dense<0.000000e+00> : vector<16xf32>
    %63 = vector.multi_reduction <add>, %62, %cst_23 [1] : vector<16x32xf32> to vector<16xf32>
    %64 = vector.shape_cast %63 : vector<16xf32> to vector<16x1xf32>
    %cst_24 = arith.constant 3.200000e+01 : f32
    %65 = vector.broadcast %cst_24 : f32 to vector<16x1xf32>
    %66 = arith.divf %64, %65 : vector<16x1xf32>
    %67 = vector.broadcast %66 : vector<16x1xf32> to vector<16x32xf32>
    %68 = arith.subf %62, %67 : vector<16x32xf32>
    %69 = arith.mulf %68, %68 : vector<16x32xf32>
    %cst_25 = arith.constant dense<0.000000e+00> : vector<16xf32>
    %70 = vector.multi_reduction <add>, %69, %cst_25 [1] : vector<16x32xf32> to vector<16xf32>
    %71 = vector.shape_cast %70 : vector<16xf32> to vector<16x1xf32>
    %cst_26 = arith.constant 3.200000e+01 : f32
    %72 = vector.broadcast %cst_26 : f32 to vector<16x1xf32>
    %73 = arith.divf %71, %72 : vector<16x1xf32>
    %74 = vector.broadcast %66 : vector<16x1xf32> to vector<16x32xf32>
    %75 = arith.subf %62, %74 : vector<16x32xf32>
    %cst_27 = arith.constant 9.99999974E-6 : f32
    %76 = vector.broadcast %cst_27 : f32 to vector<16x1xf32>
    %77 = arith.addf %73, %76 : vector<16x1xf32>
    %78 = math.rsqrt %77 : vector<16x1xf32>
    %79 = vector.broadcast %78 : vector<16x1xf32> to vector<16x32xf32>
    %80 = arith.mulf %75, %79 : vector<16x32xf32>
    %81 = vector.broadcast %5 : vector<1x32xf32> to vector<16x32xf32>
    %82 = arith.mulf %80, %81 : vector<16x32xf32>
    %83 = vector.broadcast %6 : vector<1x32xf32> to vector<16x32xf32>
    %84 = arith.addf %82, %83 : vector<16x32xf32>
    %c0_28 = arith.constant 0 : index
    %c0_29 = arith.constant 0 : index
    %c0_30 = arith.constant 0 : index
    %85 = vector.load %arg5[%c0_28, %c0_29, %c0_30] : memref<2x32x128xf32, #tpu.memory_space<vmem>>, vector<1x32x128xf32>
    %86 = vector.shape_cast %85 : vector<1x32x128xf32> to vector<32x128xf32>
    %cst_31 = arith.constant dense<0.000000e+00> : vector<16x128xf32>
    %87 = tpu.matmul %84, %86, %cst_31 {dimension_numbers = #tpu.dot_dimension_numbers<[1], [0], [0], [1], [0, 0, 1, 1], [], []>} : vector<16x32xf32>, vector<32x128xf32>, vector<16x128xf32> -> vector<16x128xf32>
    %88 = vector.broadcast %8 : vector<1x128xf32> to vector<16x128xf32>
    %89 = arith.addf %87, %88 : vector<16x128xf32>
    %cst_32 = arith.constant 5.000000e-01 : f32
    %90 = vector.broadcast %cst_32 : f32 to vector<16x128xf32>
    %91 = arith.mulf %90, %89 : vector<16x128xf32>
    %cst_33 = arith.constant 0.707106769 : f32
    %92 = vector.broadcast %cst_33 : f32 to vector<16x128xf32>
    %93 = arith.mulf %89, %92 : vector<16x128xf32>
    %94 = math.erf %93 : vector<16x128xf32>
    %cst_34 = arith.constant 1.000000e+00 : f32
    %95 = vector.broadcast %cst_34 : f32 to vector<16x128xf32>
    %96 = arith.addf %95, %94 : vector<16x128xf32>
    %97 = arith.mulf %91, %96 : vector<16x128xf32>
    %c0_35 = arith.constant 0 : index
    %c0_36 = arith.constant 0 : index
    %c0_37 = arith.constant 0 : index
    %98 = vector.load %arg6[%c0_35, %c0_36, %c0_37] : memref<2x128x32xf32, #tpu.memory_space<vmem>>, vector<1x128x32xf32>
    %99 = vector.shape_cast %98 : vector<1x128x32xf32> to vector<128x32xf32>
    %cst_38 = arith.constant dense<0.000000e+00> : vector<16x32xf32>
    %100 = tpu.matmul %97, %99, %cst_38 {dimension_numbers = #tpu.dot_dimension_numbers<[1], [0], [0], [1], [0, 0, 1, 1], [], []>} : vector<16x128xf32>, vector<128x32xf32>, vector<16x32xf32> -> vector<16x32xf32>
    %101 = vector.broadcast %9 : vector<1x32xf32> to vector<16x32xf32>
    %102 = arith.addf %100, %101 : vector<16x32xf32>
    %103 = arith.addf %62, %102 : vector<16x32xf32>
    %c1 = arith.constant 1 : index
    %c0_39 = arith.constant 0 : index
    %c0_40 = arith.constant 0 : index
    %104 = vector.load %arg2[%c1, %c0_39, %c0_40] : memref<2x8x128xf32, #tpu.memory_space<vmem>>, vector<1x8x128xf32>
    %105 = vector.shape_cast %104 : vector<1x8x128xf32> to vector<8x128xf32>
    %106 = vector.extract_strided_slice %105 {offsets = [0, 0], sizes = [1, 32], strides = [1, 1]} : vector<8x128xf32> to vector<1x32xf32>
    %107 = vector.extract_strided_slice %105 {offsets = [1, 0], sizes = [1, 32], strides = [1, 1]} : vector<8x128xf32> to vector<1x32xf32>
    %108 = vector.extract_strided_slice %105 {offsets = [3, 0], sizes = [1, 32], strides = [1, 1]} : vector<8x128xf32> to vector<1x32xf32>
    %109 = vector.extract_strided_slice %105 {offsets = [4, 0], sizes = [1, 32], strides = [1, 1]} : vector<8x128xf32> to vector<1x32xf32>
    %110 = vector.extract_strided_slice %105 {offsets = [2, 0], sizes = [1, 32], strides = [1, 1]} : vector<8x128xf32> to vector<1x32xf32>
    %111 = vector.extract_strided_slice %105 {offsets = [6, 0], sizes = [1, 128], strides = [1, 1]} : vector<8x128xf32> to vector<1x128xf32>
    %112 = vector.extract_strided_slice %105 {offsets = [5, 0], sizes = [1, 32], strides = [1, 1]} : vector<8x128xf32> to vector<1x32xf32>
    %cst_41 = arith.constant dense<0.000000e+00> : vector<16xf32>
    %113 = vector.multi_reduction <add>, %103, %cst_41 [1] : vector<16x32xf32> to vector<16xf32>
    %114 = vector.shape_cast %113 : vector<16xf32> to vector<16x1xf32>
    %cst_42 = arith.constant 3.200000e+01 : f32
    %115 = vector.broadcast %cst_42 : f32 to vector<16x1xf32>
    %116 = arith.divf %114, %115 : vector<16x1xf32>
    %117 = vector.broadcast %116 : vector<16x1xf32> to vector<16x32xf32>
    %118 = arith.subf %103, %117 : vector<16x32xf32>
    %119 = arith.mulf %118, %118 : vector<16x32xf32>
    %cst_43 = arith.constant dense<0.000000e+00> : vector<16xf32>
    %120 = vector.multi_reduction <add>, %119, %cst_43 [1] : vector<16x32xf32> to vector<16xf32>
    %121 = vector.shape_cast %120 : vector<16xf32> to vector<16x1xf32>
    %cst_44 = arith.constant 3.200000e+01 : f32
    %122 = vector.broadcast %cst_44 : f32 to vector<16x1xf32>
    %123 = arith.divf %121, %122 : vector<16x1xf32>
    %124 = vector.broadcast %116 : vector<16x1xf32> to vector<16x32xf32>
    %125 = arith.subf %103, %124 : vector<16x32xf32>
    %cst_45 = arith.constant 9.99999974E-6 : f32
    %126 = vector.broadcast %cst_45 : f32 to vector<16x1xf32>
    %127 = arith.addf %123, %126 : vector<16x1xf32>
    %128 = math.rsqrt %127 : vector<16x1xf32>
    %129 = vector.broadcast %128 : vector<16x1xf32> to vector<16x32xf32>
    %130 = arith.mulf %125, %129 : vector<16x32xf32>
    %131 = vector.broadcast %106 : vector<1x32xf32> to vector<16x32xf32>
    %132 = arith.mulf %130, %131 : vector<16x32xf32>
    %133 = vector.broadcast %107 : vector<1x32xf32> to vector<16x32xf32>
    %134 = arith.addf %132, %133 : vector<16x32xf32>
    %135 = vector.shape_cast %134 : vector<16x32xf32> to vector<2x8x32xf32>
    %136 = vector.shape_cast %135 : vector<2x8x32xf32> to vector<2x1x8x32xf32>
    %137 = vector.shape_cast %136 : vector<2x1x8x32xf32> to vector<2x1x8x32xf32>
    %138 = vector.broadcast %137 : vector<2x1x8x32xf32> to vector<2x4x8x32xf32>
    %139 = vector.shape_cast %138 : vector<2x4x8x32xf32> to vector<8x8x32xf32>
    %c1_46 = arith.constant 1 : index
    %c0_47 = arith.constant 0 : index
    %c0_48 = arith.constant 0 : index
    %c0_49 = arith.constant 0 : index
    %140 = vector.load %arg3[%c1_46, %c0_47, %c0_48, %c0_49] : memref<2x8x32x24xf32, #tpu.memory_space<vmem>>, vector<1x8x32x24xf32>
    %141 = vector.shape_cast %140 : vector<1x8x32x24xf32> to vector<8x32x24xf32>
    "tpu.trace_start"() <{level = 10 : i32, message = "xnd,xdf->xnf"}> : () -> ()
    %cst_50 = arith.constant dense<0.000000e+00> : vector<8x8x24xf32>
    %142 = tpu.matmul %139, %141, %cst_50 {dimension_numbers = #tpu.dot_dimension_numbers<[2], [1], [1], [2], [0, 0, 0, 1, 1, 2], [0], [0]>} : vector<8x8x32xf32>, vector<8x32x24xf32>, vector<8x8x24xf32> -> vector<8x8x24xf32>
    "tpu.trace_stop"() : () -> ()
    %143 = vector.extract_strided_slice %142 {offsets = [0, 0, 0], sizes = [8, 8, 8], strides = [1, 1, 1]} : vector<8x8x24xf32> to vector<8x8x8xf32>
    %144 = vector.extract_strided_slice %142 {offsets = [0, 0, 8], sizes = [8, 8, 8], strides = [1, 1, 1]} : vector<8x8x24xf32> to vector<8x8x8xf32>
    %145 = vector.extract_strided_slice %142 {offsets = [0, 0, 16], sizes = [8, 8, 8], strides = [1, 1, 1]} : vector<8x8x24xf32> to vector<8x8x8xf32>
    "tpu.trace_start"() <{level = 10 : i32, message = "xqe,xke->xqk"}> : () -> ()
    %cst_51 = arith.constant dense<0.000000e+00> : vector<8x8x8xf32>
    %146 = tpu.matmul %143, %144, %cst_51 {dimension_numbers = #tpu.dot_dimension_numbers<[2], [2], [1], [1], [0, 0, 0, 1, 1, 1], [0], [0]>} : vector<8x8x8xf32>, vector<8x8x8xf32>, vector<8x8x8xf32> -> vector<8x8x8xf32>
    "tpu.trace_stop"() : () -> ()
    %cst_52 = arith.constant dense<0xFF800000> : vector<8x8xf32>
    %147 = vector.multi_reduction <maximumf>, %146, %cst_52 [2] : vector<8x8x8xf32> to vector<8x8xf32>
    %148 = vector.shape_cast %147 : vector<8x8xf32> to vector<8x8x1xf32>
    %149 = vector.broadcast %148 : vector<8x8x1xf32> to vector<8x8x8xf32>
    %150 = arith.subf %146, %149 : vector<8x8x8xf32>
    %151 = math.exp %150 : vector<8x8x8xf32>
    %cst_53 = arith.constant dense<0.000000e+00> : vector<8x8xf32>
    %152 = vector.multi_reduction <add>, %151, %cst_53 [2] : vector<8x8x8xf32> to vector<8x8xf32>
    %153 = vector.shape_cast %152 : vector<8x8xf32> to vector<8x8x1xf32>
    %154 = vector.broadcast %153 : vector<8x8x1xf32> to vector<8x8x8xf32>
    %155 = arith.divf %151, %154 : vector<8x8x8xf32>
    "tpu.trace_start"() <{level = 10 : i32, message = "xqk,xke->xqe"}> : () -> ()
    %cst_54 = arith.constant dense<0.000000e+00> : vector<8x8x8xf32>
    %156 = tpu.matmul %155, %145, %cst_54 {dimension_numbers = #tpu.dot_dimension_numbers<[2], [1], [1], [2], [0, 0, 0, 1, 1, 2], [0], [0]>} : vector<8x8x8xf32>, vector<8x8x8xf32>, vector<8x8x8xf32> -> vector<8x8x8xf32>
    "tpu.trace_stop"() : () -> ()
    %c1_55 = arith.constant 1 : index
    %c0_56 = arith.constant 0 : index
    %c0_57 = arith.constant 0 : index
    %c0_58 = arith.constant 0 : index
    %157 = vector.load %arg4[%c1_55, %c0_56, %c0_57, %c0_58] : memref<2x8x8x32xf32, #tpu.memory_space<vmem>>, vector<1x8x8x32xf32>
    %158 = vector.shape_cast %157 : vector<1x8x8x32xf32> to vector<8x8x32xf32>
    "tpu.trace_start"() <{level = 10 : i32, message = "xne,xed->xnd"}> : () -> ()
    %cst_59 = arith.constant dense<0.000000e+00> : vector<8x8x32xf32>
    %159 = tpu.matmul %156, %158, %cst_59 {dimension_numbers = #tpu.dot_dimension_numbers<[2], [1], [1], [2], [0, 0, 0, 1, 1, 2], [0], [0]>} : vector<8x8x8xf32>, vector<8x8x32xf32>, vector<8x8x32xf32> -> vector<8x8x32xf32>
    "tpu.trace_stop"() : () -> ()
    %160 = vector.shape_cast %159 : vector<8x8x32xf32> to vector<2x4x8x32xf32>
    %cst_60 = arith.constant dense<0.000000e+00> : vector<2x8x32xf32>
    %161 = vector.multi_reduction <add>, %160, %cst_60 [1] : vector<2x4x8x32xf32> to vector<2x8x32xf32>
    %162 = vector.shape_cast %161 : vector<2x8x32xf32> to vector<16x32xf32>
    %163 = arith.addf %103, %162 : vector<16x32xf32>
    %164 = vector.broadcast %110 : vector<1x32xf32> to vector<16x32xf32>
    %165 = arith.addf %163, %164 : vector<16x32xf32>
    %cst_61 = arith.constant dense<0.000000e+00> : vector<16xf32>
    %166 = vector.multi_reduction <add>, %165, %cst_61 [1] : vector<16x32xf32> to vector<16xf32>
    %167 = vector.shape_cast %166 : vector<16xf32> to vector<16x1xf32>
    %cst_62 = arith.constant 3.200000e+01 : f32
    %168 = vector.broadcast %cst_62 : f32 to vector<16x1xf32>
    %169 = arith.divf %167, %168 : vector<16x1xf32>
    %170 = vector.broadcast %169 : vector<16x1xf32> to vector<16x32xf32>
    %171 = arith.subf %165, %170 : vector<16x32xf32>
    %172 = arith.mulf %171, %171 : vector<16x32xf32>
    %cst_63 = arith.constant dense<0.000000e+00> : vector<16xf32>
    %173 = vector.multi_reduction <add>, %172, %cst_63 [1] : vector<16x32xf32> to vector<16xf32>
    %174 = vector.shape_cast %173 : vector<16xf32> to vector<16x1xf32>
    %cst_64 = arith.constant 3.200000e+01 : f32
    %175 = vector.broadcast %cst_64 : f32 to vector<16x1xf32>
    %176 = arith.divf %174, %175 : vector<16x1xf32>
    %177 = vector.broadcast %169 : vector<16x1xf32> to vector<16x32xf32>
    %178 = arith.subf %165, %177 : vector<16x32xf32>
    %cst_65 = arith.constant 9.99999974E-6 : f32
    %179 = vector.broadcast %cst_65 : f32 to vector<16x1xf32>
    %180 = arith.addf %176, %179 : vector<16x1xf32>
    %181 = math.rsqrt %180 : vector<16x1xf32>
    %182 = vector.broadcast %181 : vector<16x1xf32> to vector<16x32xf32>
    %183 = arith.mulf %178, %182 : vector<16x32xf32>
    %184 = vector.broadcast %108 : vector<1x32xf32> to vector<16x32xf32>
    %185 = arith.mulf %183, %184 : vector<16x32xf32>
    %186 = vector.broadcast %109 : vector<1x32xf32> to vector<16x32xf32>
    %187 = arith.addf %185, %186 : vector<16x32xf32>
    %c1_66 = arith.constant 1 : index
    %c0_67 = arith.constant 0 : index
    %c0_68 = arith.constant 0 : index
    %188 = vector.load %arg5[%c1_66, %c0_67, %c0_68] : memref<2x32x128xf32, #tpu.memory_space<vmem>>, vector<1x32x128xf32>
    %189 = vector.shape_cast %188 : vector<1x32x128xf32> to vector<32x128xf32>
    %cst_69 = arith.constant dense<0.000000e+00> : vector<16x128xf32>
    %190 = tpu.matmul %187, %189, %cst_69 {dimension_numbers = #tpu.dot_dimension_numbers<[1], [0], [0], [1], [0, 0, 1, 1], [], []>} : vector<16x32xf32>, vector<32x128xf32>, vector<16x128xf32> -> vector<16x128xf32>
    %191 = vector.broadcast %111 : vector<1x128xf32> to vector<16x128xf32>
    %192 = arith.addf %190, %191 : vector<16x128xf32>
    %cst_70 = arith.constant 5.000000e-01 : f32
    %193 = vector.broadcast %cst_70 : f32 to vector<16x128xf32>
    %194 = arith.mulf %193, %192 : vector<16x128xf32>
    %cst_71 = arith.constant 0.707106769 : f32
    %195 = vector.broadcast %cst_71 : f32 to vector<16x128xf32>
    %196 = arith.mulf %192, %195 : vector<16x128xf32>
    %197 = math.erf %196 : vector<16x128xf32>
    %cst_72 = arith.constant 1.000000e+00 : f32
    %198 = vector.broadcast %cst_72 : f32 to vector<16x128xf32>
    %199 = arith.addf %198, %197 : vector<16x128xf32>
    %200 = arith.mulf %194, %199 : vector<16x128xf32>
    %c1_73 = arith.constant 1 : index
    %c0_74 = arith.constant 0 : index
    %c0_75 = arith.constant 0 : index
    %201 = vector.load %arg6[%c1_73, %c0_74, %c0_75] : memref<2x128x32xf32, #tpu.memory_space<vmem>>, vector<1x128x32xf32>
    %202 = vector.shape_cast %201 : vector<1x128x32xf32> to vector<128x32xf32>
    %cst_76 = arith.constant dense<0.000000e+00> : vector<16x32xf32>
    %203 = tpu.matmul %200, %202, %cst_76 {dimension_numbers = #tpu.dot_dimension_numbers<[1], [0], [0], [1], [0, 0, 1, 1], [], []>} : vector<16x128xf32>, vector<128x32xf32>, vector<16x32xf32> -> vector<16x32xf32>
    %204 = vector.broadcast %112 : vector<1x32xf32> to vector<16x32xf32>
    %205 = arith.addf %203, %204 : vector<16x32xf32>
    %206 = arith.addf %165, %205 : vector<16x32xf32>
    %c0_77 = arith.constant 0 : index
    %c0_78 = arith.constant 0 : index
    %207 = vector.load %arg7[%c0_77, %c0_78] : memref<16x32xf32, #tpu.memory_space<vmem>>, vector<16x32xf32>
    tpu.vector_store %arg7[%c0_77, %c0_78], %206 {strides = array<i32>} : memref<16x32xf32, #tpu.memory_space<vmem>>, vector<16x32xf32>,
    return
  }
  func.func @transform_0(%arg0: i32) -> (i32, i32) {
    %c0_i32 = arith.constant 0 : i32
    %c0_i32_0 = arith.constant 0 : i32
    %c0_i32_1 = arith.constant 0 : i32
    return %c0_i32, %c0_i32_0 : i32, i32
  }
  func.func @transform_1(%arg0: i32) -> (i32, i32, i32) {
    %c0_i32 = arith.constant 0 : i32
    %c0_i32_0 = arith.constant 0 : i32
    %c0_i32_1 = arith.constant 0 : i32
    %c0_i32_2 = arith.constant 0 : i32
    return %c0_i32, %c0_i32_0, %c0_i32_1 : i32, i32, i32
  }
  func.func @transform_2(%arg0: i32) -> (i32, i32, i32, i32) {
    %c0_i32 = arith.constant 0 : i32
    %c0_i32_0 = arith.constant 0 : i32
    %c0_i32_1 = arith.constant 0 : i32
    %c0_i32_2 = arith.constant 0 : i32
    %c0_i32_3 = arith.constant 0 : i32
    return %c0_i32, %c0_i32_0, %c0_i32_1, %c0_i32_2 : i32, i32, i32, i32
  }
  func.func @transform_3(%arg0: i32) -> (i32, i32, i32, i32) {
    %c0_i32 = arith.constant 0 : i32
    %c0_i32_0 = arith.constant 0 : i32
    %c0_i32_1 = arith.constant 0 : i32
    %c0_i32_2 = arith.constant 0 : i32
    %c0_i32_3 = arith.constant 0 : i32
    return %c0_i32, %c0_i32_0, %c0_i32_1, %c0_i32_2 : i32, i32, i32, i32
  }
  func.func @transform_4(%arg0: i32) -> (i32, i32, i32) {
    %c0_i32 = arith.constant 0 : i32
    %c0_i32_0 = arith.constant 0 : i32
    %c0_i32_1 = arith.constant 0 : i32
    %c0_i32_2 = arith.constant 0 : i32
    return %c0_i32, %c0_i32_0, %c0_i32_1 : i32, i32, i32
  }
  func.func @transform_5(%arg0: i32) -> (i32, i32, i32) {
    %c0_i32 = arith.constant 0 : i32
    %c0_i32_0 = arith.constant 0 : i32
    %c0_i32_1 = arith.constant 0 : i32
    %c0_i32_2 = arith.constant 0 : i32
    return %c0_i32, %c0_i32_0, %c0_i32_1 : i32, i32, i32
  }
  func.func @transform_6(%arg0: i32) -> (i32, i32) {
    %c0_i32 = arith.constant 0 : i32
    %c0_i32_0 = arith.constant 0 : i32
    %c0_i32_1 = arith.constant 0 : i32
    return %c0_i32, %c0_i32_0 : i32, i32
  }
}

</mosaic_0001>

<llo_original>
// kernel: transformer_forward.1
$region0: #{transformer_forward.1}
  #allocation0 [shape = 'u32[]', space=smem, size = 0x4, offset = 0x4, fixed_abs, tag = 'smem constant byte address 0x4 - core index']
  #allocation1 [shape = 'u32[72,128]{1,0:T(1,128)}', space=vmem, size = 0x9000, scoped, tag = 'internal scratch']
  %s0 = inlined_call_operand.vmem [shape: f32[16,32], index: 0, kind: input, shape index: {}]
  %s1 = inlined_call_operand.vmem [shape: f32[2,8,128], index: 1, kind: input, shape index: {}]
  %s2 = inlined_call_operand.vmem [shape: f32[2,8,32,24], index: 2, kind: input, shape index: {}]
  %s3 = inlined_call_operand.vmem [shape: f32[2,8,8,32], index: 3, kind: input, shape index: {}]
  %s4 = inlined_call_operand.vmem [shape: f32[2,32,128], index: 4, kind: input, shape index: {}]
  %s5 = inlined_call_operand.vmem [shape: f32[2,128,32], index: 5, kind: input, shape index: {}]
  %s6 = inlined_call_operand.hbm [shape: f32[16,32], index: 6, kind: output, shape index: {}]
  %s7 = sld [smem:[#allocation0]]
  $region34: #{transformer_forward.1} parent=0
    _
  %s9 = ssub.s32 1, %s7
  %s10 = scalar_select 0, %s9, %s7
  $region1: #{transformer_forward.1} parent=0
    #allocation2 [shape = 'u8[8192]{0}', space=vmem, size = 0x2000, scoped, tag = 'output window, operand 0, single buffered']
    #allocation3 [shape = 's32[1]{0}', space=sflag, size = 0x4, scoped, tag = 'scoped memory for transformer_forward.1']
    %11 = vsyncpa [#allocation3], 0
    // Predicated region
    $region2: #{transformer_forward.1} parent=1 // pred_check
      _
    $region3: #{transformer_forward.1} parent=1 // pred_check_branch
      %13 = sbr.rel (0) target = $region5
    $region4: #{transformer_forward.1} parent=1 // pred_region
      _
    $region5: #{transformer_forward.1} parent=1 // pred_fallthru
      _
    // Predicated region
    $region6: #{transformer_forward.1} parent=1 // pred_check
      _
    $region7: #{transformer_forward.1} parent=1 // pred_check_branch
      %15 = sbr.rel (0) target = $region9
    $region8: #{transformer_forward.1} parent=1 // pred_region
      _
    $region9: #{transformer_forward.1} parent=1 // pred_fallthru
      _
    // Predicated region
    $region10: #{transformer_forward.1} parent=1 // pred_check
      _
    $region11: #{transformer_forward.1} parent=1 // pred_check_branch
      %17 = sbr.rel (0) target = $region13
    $region12: #{transformer_forward.1} parent=1 // pred_region
      _
    $region13: #{transformer_forward.1} parent=1 // pred_fallthru
      _
    // Predicated region
    $region14: #{transformer_forward.1} parent=1 // pred_check
      _
    $region15: #{transformer_forward.1} parent=1 // pred_check_branch
      %19 = sbr.rel (0) target = $region17
    $region16: #{transformer_forward.1} parent=1 // pred_region
      _
    $region17: #{transformer_forward.1} parent=1 // pred_fallthru
      _
    // Predicated region
    $region18: #{transformer_forward.1} parent=1 // pred_check
      _
    $region19: #{transformer_forward.1} parent=1 // pred_check_branch
      %21 = sbr.rel (0) target = $region21
    $region20: #{transformer_forward.1} parent=1 // pred_region
      _
    $region21: #{transformer_forward.1} parent=1 // pred_fallthru
      _
    // Predicated region
    $region22: #{transformer_forward.1} parent=1 // pred_check
      _
    $region23: #{transformer_forward.1} parent=1 // pred_check_branch
      %23 = sbr.rel (0) target = $region25
    $region24: #{transformer_forward.1} parent=1 // pred_region
      _
    $region25: #{transformer_forward.1} parent=1 // pred_fallthru
      _
    %v24 = vld [vmem:[%s0] sm:$0xff]
    %v25 = vld [vmem:[%s0 + $0x8] sm:$0xff]
    %v26 = vld [vmem:[%s1] sm:$0xff]
    %vm27 = vcmask 261120
    %v28 = vsel %vm27, %v24, 0.0
    %29 = vadd.xlane.f32.xlu0 %v28
    %v30 = vpop.xlane.xlu0 %29
    %v31 = vsel %vm27, %v25, 0.0
    %32 = vadd.xlane.f32.xlu0 %v31
    %v33 = vpop.xlane.xlu0 %32
    %v34 = vrcp.pop 32.0
    %v35 = vmul.f32 32.0, %v34
    %v36 = vsub.f32 1.0, %v35
    %v37 = vmul.f32 %v34, %v36
    %v38 = vadd.f32 %v34, %v37
    %vm39 = vweird.f32 %v34
    %v40 = vsel %vm39, %v34, %v38
    %v41 = vmul.f32 %v30, %v40
    %v42 = vmul.f32 %v33, %v40
    %v43 = vsub.f32 %v24, %v41
    %v44 = vsub.f32 %v25, %v42
    %v45 = vmul.f32 %v43, %v43
    %v46 = vmul.f32 %v44, %v44
    %v47 = vsel %vm27, %v45, 0.0
    %48 = vadd.xlane.f32.xlu0 %v47
    %v49 = vpop.xlane.xlu0 %48
    %v50 = vsel %vm27, %v46, 0.0
    %51 = vadd.xlane.f32.xlu0 %v50
    %v52 = vpop.xlane.xlu0 %51
    %v53 = vmul.f32 %v49, %v40
    %v54 = vmul.f32 %v52, %v40
    %v55 = vadd.f32 %v53, 1e-05
    %v56 = vadd.f32 %v54, 1e-05
    %v57 = vrsqrt.pop %v55
    %v58 = vmul.f32 %v57, %v55
    %v59 = vmul.f32 %v58, %v57
    %v60 = vmul.f32 0.5, %v59
    %v61 = vsub.f32 1.5, %v60
    %v62 = vmul.f32 %v57, %v61
    %vm63 = vweird.f32 %v55
    %vm64 = vweird.f32 %v57
    %vm65 = vmor %vm63, %vm64
    %v66 = vsel %vm65, %v57, %v62
    %v67 = vrsqrt.pop %v56
    %v68 = vmul.f32 %v67, %v56
    %v69 = vmul.f32 %v68, %v67
    %v70 = vmul.f32 0.5, %v69
    %v71 = vsub.f32 1.5, %v70
    %v72 = vmul.f32 %v67, %v71
    %vm73 = vweird.f32 %v56
    %vm74 = vweird.f32 %v67
    %vm75 = vmor %vm73, %vm74
    %v76 = vsel %vm75, %v67, %v72
    %v77 = vmul.f32 %v43, %v66
    %v78 = vmul.f32 %v44, %v76
    %v79 = vperm.slane %v26, 0
    %v80 = vmul.f32 %v77, %v79
    %v81 = vmul.f32 %v78, %v79
    %v82 = vperm.slane %v26, 1
    %v83 = vadd.f32 %v80, %v82
    %v84 = vadd.f32 %v81, %v82
    %v85 = vld [vmem:[%s2] sm:$0xff]
    %v86 = vld [vmem:[%s2 + $0x8] sm:$0xff]
    %v87 = vld [vmem:[%s2 + $0x10] sm:$0xff]
    %v88 = vld [vmem:[%s2 + $0x18] sm:$0xff]
    %v89 = vld [vmem:[%s2 + $0x20] sm:$0xff]
    %v90 = vld [vmem:[%s2 + $0x28] sm:$0xff]
    %v91 = vld [vmem:[%s2 + $0x30] sm:$0xff]
    %v92 = vld [vmem:[%s2 + $0x38] sm:$0xff]
    %v93 = vld [vmem:[%s2 + $0x40] sm:$0xff]
    %v94 = vld [vmem:[%s2 + $0x48] sm:$0xff]
    %v95 = vld [vmem:[%s2 + $0x50] sm:$0xff]
    %v96 = vld [vmem:[%s2 + $0x58] sm:$0xff]
    %v97 = vld [vmem:[%s2 + $0x60] sm:$0xff]
    %v98 = vld [vmem:[%s2 + $0x68] sm:$0xff]
    %v99 = vld [vmem:[%s2 + $0x70] sm:$0xff]
    %v100 = vld [vmem:[%s2 + $0x78] sm:$0xff]
    %v101 = vld [vmem:[%s2 + $0x80] sm:$0xff]
    %v102 = vld [vmem:[%s2 + $0x88] sm:$0xff]
    %v103 = vld [vmem:[%s2 + $0x90] sm:$0xff]
    %v104 = vld [vmem:[%s2 + $0x98] sm:$0xff]
    %v105 = vld [vmem:[%s2 + $0xa0] sm:$0xff]
    %v106 = vld [vmem:[%s2 + $0xa8] sm:$0xff]
    %v107 = vld [vmem:[%s2 + $0xb0] sm:$0xff]
    %v108 = vld [vmem:[%s2 + $0xb8] sm:$0xff]
    %v109 = vld [vmem:[%s2 + $0xc0] sm:$0xff]
    %v110 = vld [vmem:[%s2 + $0xc8] sm:$0xff]
    %v111 = vld [vmem:[%s2 + $0xd0] sm:$0xff]
    %v112 = vld [vmem:[%s2 + $0xd8] sm:$0xff]
    %v113 = vld [vmem:[%s2 + $0xe0] sm:$0xff]
    %v114 = vld [vmem:[%s2 + $0xe8] sm:$0xff]
    %v115 = vld [vmem:[%s2 + $0xf0] sm:$0xff]
    %v116 = vld [vmem:[%s2 + $0xf8] sm:$0xff]
    %v118 = vsel %vm27, %v83, 0
    %120 = vmatpush.msra.mxu0 0.0
    %121 = vmatpush.msra.mxu0 0.0
    %122 = vmatpush.msra.mxu0 0.0
    %123 = vmatpush.msra.mxu0 0.0
    %124 = vmatpush.msra.mxu0 0.0
    %125 = vmatpush.msra.mxu0 0.0
    %126 = vmatpush.msra.mxu0 0.0
    %127 = vmatpush.msra.mxu0 0.0
    %128 = vmatpush.msra.mxu0 0.0
    %129 = vmatpush.msra.mxu0 0.0
    %130 = vmatpush.msra.mxu0 0.0
    %131 = vmatpush.msra.mxu0 0.0
    %132 = vmatpush.msra.mxu0 %v88
    %133 = vmatpush.msra.mxu0 %v87
    %134 = vmatpush.msra.mxu0 %v86
    %135 = vmatpush.msra.mxu0 %v85
    %136 = vmatmul.f32.gmra.mxu0 %v118
    %v137 = vpop.f32.mrf.mxu0
    %v138 = vadd.f32 0.0, %v137
    %139 = vdwg.mxu0
    %140 = vmatpush.msra.mxu0 0.0
    %141 = vmatpush.msra.mxu0 0.0
    %142 = vmatpush.msra.mxu0 0.0
    %143 = vmatpush.msra.mxu0 0.0
    %144 = vmatpush.msra.mxu0 0.0
    %145 = vmatpush.msra.mxu0 0.0
    %146 = vmatpush.msra.mxu0 0.0
    %147 = vmatpush.msra.mxu0 0.0
    %148 = vmatpush.msra.mxu0 0.0
    %149 = vmatpush.msra.mxu0 0.0
    %150 = vmatpush.msra.mxu0 0.0
    %151 = vmatpush.msra.mxu0 0.0
    %152 = vmatpush.msra.mxu0 %v92
    %153 = vmatpush.msra.mxu0 %v91
    %154 = vmatpush.msra.mxu0 %v90
    %155 = vmatpush.msra.mxu0 %v89
    %156 = vmatmul.f32.gmra.mxu0 %v118
    %v157 = vpop.f32.mrf.mxu0
    %v158 = vadd.f32 0.0, %v157
    %159 = vdwg.mxu0
    %160 = vmatpush.msra.mxu0 0.0
    %161 = vmatpush.msra.mxu0 0.0
    %162 = vmatpush.msra.mxu0 0.0
    %163 = vmatpush.msra.mxu0 0.0
    %164 = vmatpush.msra.mxu0 0.0
    %165 = vmatpush.msra.mxu0 0.0
    %166 = vmatpush.msra.mxu0 0.0
    %167 = vmatpush.msra.mxu0 0.0
    %168 = vmatpush.msra.mxu0 0.0
    %169 = vmatpush.msra.mxu0 0.0
    %170 = vmatpush.msra.mxu0 0.0
    %171 = vmatpush.msra.mxu0 0.0
    %172 = vmatpush.msra.mxu0 %v96
    %173 = vmatpush.msra.mxu0 %v95
    %174 = vmatpush.msra.mxu0 %v94
    %175 = vmatpush.msra.mxu0 %v93
    %176 = vmatmul.f32.gmra.mxu0 %v118
    %v177 = vpop.f32.mrf.mxu0
    %v178 = vadd.f32 0.0, %v177
    %179 = vdwg.mxu0
    %180 = vmatpush.msra.mxu0 0.0
    %181 = vmatpush.msra.mxu0 0.0
    %182 = vmatpush.msra.mxu0 0.0
    %183 = vmatpush.msra.mxu0 0.0
    %184 = vmatpush.msra.mxu0 0.0
    %185 = vmatpush.msra.mxu0 0.0
    %186 = vmatpush.msra.mxu0 0.0
    %187 = vmatpush.msra.mxu0 0.0
    %188 = vmatpush.msra.mxu0 0.0
    %189 = vmatpush.msra.mxu0 0.0
    %190 = vmatpush.msra.mxu0 0.0
    %191 = vmatpush.msra.mxu0 0.0
    %192 = vmatpush.msra.mxu0 %v100
    %193 = vmatpush.msra.mxu0 %v99
    %194 = vmatpush.msra.mxu0 %v98
    %195 = vmatpush.msra.mxu0 %v97
    %196 = vmatmul.f32.gmra.mxu0 %v118
    %v197 = vpop.f32.mrf.mxu0
    %v198 = vadd.f32 0.0, %v197
    %199 = vdwg.mxu0
    %v201 = vsel %vm27, %v84, 0
    %203 = vmatpush.msra.mxu0 0.0
    %204 = vmatpush.msra.mxu0 0.0
    %205 = vmatpush.msra.mxu0 0.0
    %206 = vmatpush.msra.mxu0 0.0
    %207 = vmatpush.msra.mxu0 0.0
    %208 = vmatpush.msra.mxu0 0.0
    %209 = vmatpush.msra.mxu0 0.0
    %210 = vmatpush.msra.mxu0 0.0
    %211 = vmatpush.msra.mxu0 0.0
    %212 = vmatpush.msra.mxu0 0.0
    %213 = vmatpush.msra.mxu0 0.0
    %214 = vmatpush.msra.mxu0 0.0
    %215 = vmatpush.msra.mxu0 %v104
    %216 = vmatpush.msra.mxu0 %v103
    %217 = vmatpush.msra.mxu0 %v102
    %218 = vmatpush.msra.mxu0 %v101
    %219 = vmatmul.f32.gmra.mxu0 %v201
    %v220 = vpop.f32.mrf.mxu0
    %v221 = vadd.f32 0.0, %v220
    %222 = vdwg.mxu0
    %223 = vmatpush.msra.mxu0 0.0
    %224 = vmatpush.msra.mxu0 0.0
    %225 = vmatpush.msra.mxu0 0.0
    %226 = vmatpush.msra.mxu0 0.0
    %227 = vmatpush.msra.mxu0 0.0
    %228 = vmatpush.msra.mxu0 0.0
    %229 = vmatpush.msra.mxu0 0.0
    %230 = vmatpush.msra.mxu0 0.0
    %231 = vmatpush.msra.mxu0 0.0
    %232 = vmatpush.msra.mxu0 0.0
    %233 = vmatpush.msra.mxu0 0.0
    %234 = vmatpush.msra.mxu0 0.0
    %235 = vmatpush.msra.mxu0 %v108
    %236 = vmatpush.msra.mxu0 %v107
    %237 = vmatpush.msra.mxu0 %v106
    %238 = vmatpush.msra.mxu0 %v105
    %239 = vmatmul.f32.gmra.mxu0 %v201
    %v240 = vpop.f32.mrf.mxu0
    %v241 = vadd.f32 0.0, %v240
    %242 = vdwg.mxu0
    %243 = vmatpush.msra.mxu0 0.0
    %244 = vmatpush.msra.mxu0 0.0
    %245 = vmatpush.msra.mxu0 0.0
    %246 = vmatpush.msra.mxu0 0.0
    %247 = vmatpush.msra.mxu0 0.0
    %248 = vmatpush.msra.mxu0 0.0
    %249 = vmatpush.msra.mxu0 0.0
    %250 = vmatpush.msra.mxu0 0.0
    %251 = vmatpush.msra.mxu0 0.0
    %252 = vmatpush.msra.mxu0 0.0
    %253 = vmatpush.msra.mxu0 0.0
    %254 = vmatpush.msra.mxu0 0.0
    %255 = vmatpush.msra.mxu0 %v112
    %256 = vmatpush.msra.mxu0 %v111
    %257 = vmatpush.msra.mxu0 %v110
    %258 = vmatpush.msra.mxu0 %v109
    %259 = vmatmul.f32.gmra.mxu0 %v201
    %v260 = vpop.f32.mrf.mxu0
    %v261 = vadd.f32 0.0, %v260
    %262 = vdwg.mxu0
    %263 = vmatpush.msra.mxu0 0.0
    %264 = vmatpush.msra.mxu0 0.0
    %265 = vmatpush.msra.mxu0 0.0
    %266 = vmatpush.msra.mxu0 0.0
    %267 = vmatpush.msra.mxu0 0.0
    %268 = vmatpush.msra.mxu0 0.0
    %269 = vmatpush.msra.mxu0 0.0
    %270 = vmatpush.msra.mxu0 0.0
    %271 = vmatpush.msra.mxu0 0.0
    %272 = vmatpush.msra.mxu0 0.0
    %273 = vmatpush.msra.mxu0 0.0
    %274 = vmatpush.msra.mxu0 0.0
    %275 = vmatpush.msra.mxu0 %v116
    %276 = vmatpush.msra.mxu0 %v115
    %277 = vmatpush.msra.mxu0 %v114
    %278 = vmatpush.msra.mxu0 %v113
    %279 = vmatmul.f32.gmra.mxu0 %v201
    %v280 = vpop.f32.mrf.mxu0
    %v281 = vadd.f32 0.0, %v280
    %282 = vdwg.mxu0
    %284 = vrot.lane.b32.xlu0 %v138, 120
    %v285 = vpop.permute.xlu0 %284
    %vm286 = vcmask 64512
    %v287 = vsel %vm286, %v138, 0
    %v289 = vsel %vm286, %v285, 0
    %291 = vmatpush.xpose.msra.mxu0 0.0
    %292 = vmatpush.xpose.msra.mxu0 0.0
    %293 = vmatpush.xpose.msra.mxu0 0.0
    %294 = vmatpush.xpose.msra.mxu0 0.0
    %295 = vmatpush.xpose.msra.mxu0 0.0
    %296 = vmatpush.xpose.msra.mxu0 0.0
    %297 = vmatpush.xpose.msra.mxu0 0.0
    %298 = vmatpush.xpose.msra.mxu0 0.0
    %299 = vmatpush.xpose.msra.mxu0 0.0
    %300 = vmatpush.xpose.msra.mxu0 0.0
    %301 = vmatpush.xpose.msra.mxu0 0.0
    %302 = vmatpush.xpose.msra.mxu0 0.0
    %303 = vmatpush.xpose.msra.mxu0 0.0
    %304 = vmatpush.xpose.msra.mxu0 0.0
    %305 = vmatpush.xpose.msra.mxu0 0.0
    %306 = vmatpush.xpose.msra.mxu0 %v289
    %307 = vmatmul.f32.gmra.mxu0 %v287
    %v308 = vpop.f32.mrf.mxu0
    %v309 = vadd.f32 0.0, %v308
    %310 = vdwg.mxu0
    %312 = vrot.lane.b32.xlu0 %v158, 120
    %v313 = vpop.permute.xlu0 %312
    %v314 = vsel %vm286, %v158, 0
    %v316 = vsel %vm286, %v313, 0
    %318 = vmatpush.xpose.msra.mxu0 0.0
    %319 = vmatpush.xpose.msra.mxu0 0.0
    %320 = vmatpush.xpose.msra.mxu0 0.0
    %321 = vmatpush.xpose.msra.mxu0 0.0
    %322 = vmatpush.xpose.msra.mxu0 0.0
    %323 = vmatpush.xpose.msra.mxu0 0.0
    %324 = vmatpush.xpose.msra.mxu0 0.0
    %325 = vmatpush.xpose.msra.mxu0 0.0
    %326 = vmatpush.xpose.msra.mxu0 0.0
    %327 = vmatpush.xpose.msra.mxu0 0.0
    %328 = vmatpush.xpose.msra.mxu0 0.0
    %329 = vmatpush.xpose.msra.mxu0 0.0
    %330 = vmatpush.xpose.msra.mxu0 0.0
    %331 = vmatpush.xpose.msra.mxu0 0.0
    %332 = vmatpush.xpose.msra.mxu0 0.0
    %333 = vmatpush.xpose.msra.mxu0 %v316
    %334 = vmatmul.f32.gmra.mxu0 %v314
    %v335 = vpop.f32.mrf.mxu0
    %v336 = vadd.f32 0.0, %v335
    %337 = vdwg.mxu0
    %339 = vrot.lane.b32.xlu0 %v178, 120
    %v340 = vpop.permute.xlu0 %339
    %v341 = vsel %vm286, %v178, 0
    %v343 = vsel %vm286, %v340, 0
    %345 = vmatpush.xpose.msra.mxu0 0.0
    %346 = vmatpush.xpose.msra.mxu0 0.0
    %347 = vmatpush.xpose.msra.mxu0 0.0
    %348 = vmatpush.xpose.msra.mxu0 0.0
    %349 = vmatpush.xpose.msra.mxu0 0.0
    %350 = vmatpush.xpose.msra.mxu0 0.0
    %351 = vmatpush.xpose.msra.mxu0 0.0
    %352 = vmatpush.xpose.msra.mxu0 0.0
    %353 = vmatpush.xpose.msra.mxu0 0.0
    %354 = vmatpush.xpose.msra.mxu0 0.0
    %355 = vmatpush.xpose.msra.mxu0 0.0
    %356 = vmatpush.xpose.msra.mxu0 0.0
    %357 = vmatpush.xpose.msra.mxu0 0.0
    %358 = vmatpush.xpose.msra.mxu0 0.0
    %359 = vmatpush.xpose.msra.mxu0 0.0
    %360 = vmatpush.xpose.msra.mxu0 %v343
    %361 = vmatmul.f32.gmra.mxu0 %v341
    %v362 = vpop.f32.mrf.mxu0
    %v363 = vadd.f32 0.0, %v362
    %364 = vdwg.mxu0
    %366 = vrot.lane.b32.xlu0 %v198, 120
    %v367 = vpop.permute.xlu0 %366
    %v368 = vsel %vm286, %v198, 0
    %v370 = vsel %vm286, %v367, 0
    %372 = vmatpush.xpose.msra.mxu0 0.0
    %373 = vmatpush.xpose.msra.mxu0 0.0
    %374 = vmatpush.xpose.msra.mxu0 0.0
    %375 = vmatpush.xpose.msra.mxu0 0.0
    %376 = vmatpush.xpose.msra.mxu0 0.0
    %377 = vmatpush.xpose.msra.mxu0 0.0
    %378 = vmatpush.xpose.msra.mxu0 0.0
    %379 = vmatpush.xpose.msra.mxu0 0.0
    %380 = vmatpush.xpose.msra.mxu0 0.0
    %381 = vmatpush.xpose.msra.mxu0 0.0
    %382 = vmatpush.xpose.msra.mxu0 0.0
    %383 = vmatpush.xpose.msra.mxu0 0.0
    %384 = vmatpush.xpose.msra.mxu0 0.0
    %385 = vmatpush.xpose.msra.mxu0 0.0
    %386 = vmatpush.xpose.msra.mxu0 0.0
    %387 = vmatpush.xpose.msra.mxu0 %v370
    %388 = vmatmul.f32.gmra.mxu0 %v368
    %v389 = vpop.f32.mrf.mxu0
    %v390 = vadd.f32 0.0, %v389
    %391 = vdwg.mxu0
    %393 = vrot.lane.b32.xlu0 %v221, 120
    %v394 = vpop.permute.xlu0 %393
    %v395 = vsel %vm286, %v221, 0
    %v397 = vsel %vm286, %v394, 0
    %399 = vmatpush.xpose.msra.mxu0 0.0
    %400 = vmatpush.xpose.msra.mxu0 0.0
    %401 = vmatpush.xpose.msra.mxu0 0.0
    %402 = vmatpush.xpose.msra.mxu0 0.0
    %403 = vmatpush.xpose.msra.mxu0 0.0
    %404 = vmatpush.xpose.msra.mxu0 0.0
    %405 = vmatpush.xpose.msra.mxu0 0.0
    %406 = vmatpush.xpose.msra.mxu0 0.0
    %407 = vmatpush.xpose.msra.mxu0 0.0
    %408 = vmatpush.xpose.msra.mxu0 0.0
    %409 = vmatpush.xpose.msra.mxu0 0.0
    %410 = vmatpush.xpose.msra.mxu0 0.0
    %411 = vmatpush.xpose.msra.mxu0 0.0
    %412 = vmatpush.xpose.msra.mxu0 0.0
    %413 = vmatpush.xpose.msra.mxu0 0.0
    %414 = vmatpush.xpose.msra.mxu0 %v397
    %415 = vmatmul.f32.gmra.mxu0 %v395
    %v416 = vpop.f32.mrf.mxu0
    %v417 = vadd.f32 0.0, %v416
    %418 = vdwg.mxu0
    %420 = vrot.lane.b32.xlu0 %v241, 120
    %v421 = vpop.permute.xlu0 %420
    %v422 = vsel %vm286, %v241, 0
    %v424 = vsel %vm286, %v421, 0
    %426 = vmatpush.xpose.msra.mxu0 0.0
    %427 = vmatpush.xpose.msra.mxu0 0.0
    %428 = vmatpush.xpose.msra.mxu0 0.0
    %429 = vmatpush.xpose.msra.mxu0 0.0
    %430 = vmatpush.xpose.msra.mxu0 0.0
    %431 = vmatpush.xpose.msra.mxu0 0.0
    %432 = vmatpush.xpose.msra.mxu0 0.0
    %433 = vmatpush.xpose.msra.mxu0 0.0
    %434 = vmatpush.xpose.msra.mxu0 0.0
    %435 = vmatpush.xpose.msra.mxu0 0.0
    %436 = vmatpush.xpose.msra.mxu0 0.0
    %437 = vmatpush.xpose.msra.mxu0 0.0
    %438 = vmatpush.xpose.msra.mxu0 0.0
    %439 = vmatpush.xpose.msra.mxu0 0.0
    %440 = vmatpush.xpose.msra.mxu0 0.0
    %441 = vmatpush.xpose.msra.mxu0 %v424
    %442 = vmatmul.f32.gmra.mxu0 %v422
    %v443 = vpop.f32.mrf.mxu0
    %v444 = vadd.f32 0.0, %v443
    %445 = vdwg.mxu0
    %447 = vrot.lane.b32.xlu0 %v261, 120
    %v448 = vpop.permute.xlu0 %447
    %v449 = vsel %vm286, %v261, 0
    %v451 = vsel %vm286, %v448, 0
    %453 = vmatpush.xpose.msra.mxu0 0.0
    %454 = vmatpush.xpose.msra.mxu0 0.0
    %455 = vmatpush.xpose.msra.mxu0 0.0
    %456 = vmatpush.xpose.msra.mxu0 0.0
    %457 = vmatpush.xpose.msra.mxu0 0.0
    %458 = vmatpush.xpose.msra.mxu0 0.0
    %459 = vmatpush.xpose.msra.mxu0 0.0
    %460 = vmatpush.xpose.msra.mxu0 0.0
    %461 = vmatpush.xpose.msra.mxu0 0.0
    %462 = vmatpush.xpose.msra.mxu0 0.0
    %463 = vmatpush.xpose.msra.mxu0 0.0
    %464 = vmatpush.xpose.msra.mxu0 0.0
    %465 = vmatpush.xpose.msra.mxu0 0.0
    %466 = vmatpush.xpose.msra.mxu0 0.0
    %467 = vmatpush.xpose.msra.mxu0 0.0
    %468 = vmatpush.xpose.msra.mxu0 %v451
    %469 = vmatmul.f32.gmra.mxu0 %v449
    %v470 = vpop.f32.mrf.mxu0
    %v471 = vadd.f32 0.0, %v470
    %472 = vdwg.mxu0
    %474 = vrot.lane.b32.xlu0 %v281, 120
    %v475 = vpop.permute.xlu0 %474
    %v476 = vsel %vm286, %v281, 0
    %v478 = vsel %vm286, %v475, 0
    %480 = vmatpush.xpose.msra.mxu0 0.0
    %481 = vmatpush.xpose.msra.mxu0 0.0
    %482 = vmatpush.xpose.msra.mxu0 0.0
    %483 = vmatpush.xpose.msra.mxu0 0.0
    %484 = vmatpush.xpose.msra.mxu0 0.0
    %485 = vmatpush.xpose.msra.mxu0 0.0
    %486 = vmatpush.xpose.msra.mxu0 0.0
    %487 = vmatpush.xpose.msra.mxu0 0.0
    %488 = vmatpush.xpose.msra.mxu0 0.0
    %489 = vmatpush.xpose.msra.mxu0 0.0
    %490 = vmatpush.xpose.msra.mxu0 0.0
    %491 = vmatpush.xpose.msra.mxu0 0.0
    %492 = vmatpush.xpose.msra.mxu0 0.0
    %493 = vmatpush.xpose.msra.mxu0 0.0
    %494 = vmatpush.xpose.msra.mxu0 0.0
    %495 = vmatpush.xpose.msra.mxu0 %v478
    %496 = vmatmul.f32.gmra.mxu0 %v476
    %v497 = vpop.f32.mrf.mxu0
    %v498 = vadd.f32 0.0, %v497
    %499 = vdwg.mxu0
    %v500 = vsel %vm286, %v309, -inf
    %501 = vmax.xlane.f32.xlu0 %v500
    %v502 = vpop.xlane.xlu0 %501
    %v503 = vsel %vm286, %v336, -inf
    %504 = vmax.xlane.f32.xlu0 %v503
    %v505 = vpop.xlane.xlu0 %504
    %v506 = vsel %vm286, %v363, -inf
    %507 = vmax.xlane.f32.xlu0 %v506
    %v508 = vpop.xlane.xlu0 %507
    %v509 = vsel %vm286, %v390, -inf
    %510 = vmax.xlane.f32.xlu0 %v509
    %v511 = vpop.xlane.xlu0 %510
    %v512 = vsel %vm286, %v417, -inf
    %513 = vmax.xlane.f32.xlu0 %v512
    %v514 = vpop.xlane.xlu0 %513
    %v515 = vsel %vm286, %v444, -inf
    %516 = vmax.xlane.f32.xlu0 %v515
    %v517 = vpop.xlane.xlu0 %516
    %v518 = vsel %vm286, %v471, -inf
    %519 = vmax.xlane.f32.xlu0 %v518
    %v520 = vpop.xlane.xlu0 %519
    %v521 = vsel %vm286, %v498, -inf
    %522 = vmax.xlane.f32.xlu0 %v521
    %v523 = vpop.xlane.xlu0 %522
    %v524 = vsub.f32 %v309, %v502
    %v525 = vsub.f32 %v336, %v505
    %v526 = vsub.f32 %v363, %v508
    %v527 = vsub.f32 %v390, %v511
    %v528 = vsub.f32 %v417, %v514
    %v529 = vsub.f32 %v444, %v517
    %v530 = vsub.f32 %v471, %v520
    %v531 = vsub.f32 %v498, %v523
    %v532 = vmul.f32 %v524, 1.442695
    %v533 = vpow.pop %v532
    %v534 = vmul.f32 %v525, 1.442695
    %v535 = vpow.pop %v534
    %v536 = vmul.f32 %v526, 1.442695
    %v537 = vpow.pop %v536
    %v538 = vmul.f32 %v527, 1.442695
    %v539 = vpow.pop %v538
    %v540 = vmul.f32 %v528, 1.442695
    %v541 = vpow.pop %v540
    %v542 = vmul.f32 %v529, 1.442695
    %v543 = vpow.pop %v542
    %v544 = vmul.f32 %v530, 1.442695
    %v545 = vpow.pop %v544
    %v546 = vmul.f32 %v531, 1.442695
    %v547 = vpow.pop %v546
    %v548 = vsel %vm286, %v533, 0.0
    %549 = vadd.xlane.f32.xlu0 %v548
    %v550 = vpop.xlane.xlu0 %549
    %v551 = vsel %vm286, %v535, 0.0
    %552 = vadd.xlane.f32.xlu0 %v551
    %v553 = vpop.xlane.xlu0 %552
    %v554 = vsel %vm286, %v537, 0.0
    %555 = vadd.xlane.f32.xlu0 %v554
    %v556 = vpop.xlane.xlu0 %555
    %v557 = vsel %vm286, %v539, 0.0
    %558 = vadd.xlane.f32.xlu0 %v557
    %v559 = vpop.xlane.xlu0 %558
    %v560 = vsel %vm286, %v541, 0.0
    %561 = vadd.xlane.f32.xlu0 %v560
    %v562 = vpop.xlane.xlu0 %561
    %v563 = vsel %vm286, %v543, 0.0
    %564 = vadd.xlane.f32.xlu0 %v563
    %v565 = vpop.xlane.xlu0 %564
    %v566 = vsel %vm286, %v545, 0.0
    %567 = vadd.xlane.f32.xlu0 %v566
    %v568 = vpop.xlane.xlu0 %567
    %v569 = vsel %vm286, %v547, 0.0
    %570 = vadd.xlane.f32.xlu0 %v569
    %v571 = vpop.xlane.xlu0 %570
    %v572 = vrcp.pop %v550
    %v573 = vmul.f32 %v550, %v572
    %v574 = vsub.f32 1.0, %v573
    %v575 = vmul.f32 %v572, %v574
    %v576 = vadd.f32 %v572, %v575
    %vm577 = vweird.f32 %v550
    %vm578 = vweird.f32 %v572
    %vm579 = vmor %vm577, %vm578
    %v580 = vsel %vm579, %v572, %v576
    %v581 = vand.u32 2147483647, %v550
    %vm582 = vcmp.eq.f32.partialorder %v581, 8.507059e+37
    %v583 = vand.u32 %v550, 2147483648
    %v584 = vor.u32 1.1754944e-38, %v583
    %v585 = vsel %vm582, %v584, %v580
    %v586 = vmul.f32 %v533, %v585
    %v587 = vrcp.pop %v553
    %v588 = vmul.f32 %v553, %v587
    %v589 = vsub.f32 1.0, %v588
    %v590 = vmul.f32 %v587, %v589
    %v591 = vadd.f32 %v587, %v590
    %vm592 = vweird.f32 %v553
    %vm593 = vweird.f32 %v587
    %vm594 = vmor %vm592, %vm593
    %v595 = vsel %vm594, %v587, %v591
    %v596 = vand.u32 2147483647, %v553
    %vm597 = vcmp.eq.f32.partialorder %v596, 8.507059e+37
    %v598 = vand.u32 %v553, 2147483648
    %v599 = vor.u32 1.1754944e-38, %v598
    %v600 = vsel %vm597, %v599, %v595
    %v601 = vmul.f32 %v535, %v600
    %v602 = vrcp.pop %v556
    %v603 = vmul.f32 %v556, %v602
    %v604 = vsub.f32 1.0, %v603
    %v605 = vmul.f32 %v602, %v604
    %v606 = vadd.f32 %v602, %v605
    %vm607 = vweird.f32 %v556
    %vm608 = vweird.f32 %v602
    %vm609 = vmor %vm607, %vm608
    %v610 = vsel %vm609, %v602, %v606
    %v611 = vand.u32 2147483647, %v556
    %vm612 = vcmp.eq.f32.partialorder %v611, 8.507059e+37
    %v613 = vand.u32 %v556, 2147483648
    %v614 = vor.u32 1.1754944e-38, %v613
    %v615 = vsel %vm612, %v614, %v610
    %v616 = vmul.f32 %v537, %v615
    %v617 = vrcp.pop %v559
    %v618 = vmul.f32 %v559, %v617
    %v619 = vsub.f32 1.0, %v618
    %v620 = vmul.f32 %v617, %v619
    %v621 = vadd.f32 %v617, %v620
    %vm622 = vweird.f32 %v559
    %vm623 = vweird.f32 %v617
    %vm624 = vmor %vm622, %vm623
    %v625 = vsel %vm624, %v617, %v621
    %v626 = vand.u32 2147483647, %v559
    %vm627 = vcmp.eq.f32.partialorder %v626, 8.507059e+37
    %v628 = vand.u32 %v559, 2147483648
    %v629 = vor.u32 1.1754944e-38, %v628
    %v630 = vsel %vm627, %v629, %v625
    %v631 = vmul.f32 %v539, %v630
    %v632 = vrcp.pop %v562
    %v633 = vmul.f32 %v562, %v632
    %v634 = vsub.f32 1.0, %v633
    %v635 = vmul.f32 %v632, %v634
    %v636 = vadd.f32 %v632, %v635
    %vm637 = vweird.f32 %v562
    %vm638 = vweird.f32 %v632
    %vm639 = vmor %vm637, %vm638
    %v640 = vsel %vm639, %v632, %v636
    %v641 = vand.u32 2147483647, %v562
    %vm642 = vcmp.eq.f32.partialorder %v641, 8.507059e+37
    %v643 = vand.u32 %v562, 2147483648
    %v644 = vor.u32 1.1754944e-38, %v643
    %v645 = vsel %vm642, %v644, %v640
    %v646 = vmul.f32 %v541, %v645
    %v647 = vrcp.pop %v565
    %v648 = vmul.f32 %v565, %v647
    %v649 = vsub.f32 1.0, %v648
    %v650 = vmul.f32 %v647, %v649
    %v651 = vadd.f32 %v647, %v650
    %vm652 = vweird.f32 %v565
    %vm653 = vweird.f32 %v647
    %vm654 = vmor %vm652, %vm653
    %v655 = vsel %vm654, %v647, %v651
    %v656 = vand.u32 2147483647, %v565
    %vm657 = vcmp.eq.f32.partialorder %v656, 8.507059e+37
    %v658 = vand.u32 %v565, 2147483648
    %v659 = vor.u32 1.1754944e-38, %v658
    %v660 = vsel %vm657, %v659, %v655
    %v661 = vmul.f32 %v543, %v660
    %v662 = vrcp.pop %v568
    %v663 = vmul.f32 %v568, %v662
    %v664 = vsub.f32 1.0, %v663
    %v665 = vmul.f32 %v662, %v664
    %v666 = vadd.f32 %v662, %v665
    %vm667 = vweird.f32 %v568
    %vm668 = vweird.f32 %v662
    %vm669 = vmor %vm667, %vm668
    %v670 = vsel %vm669, %v662, %v666
    %v671 = vand.u32 2147483647, %v568
    %vm672 = vcmp.eq.f32.partialorder %v671, 8.507059e+37
    %v673 = vand.u32 %v568, 2147483648
    %v674 = vor.u32 1.1754944e-38, %v673
    %v675 = vsel %vm672, %v674, %v670
    %v676 = vmul.f32 %v545, %v675
    %v677 = vrcp.pop %v571
    %v678 = vmul.f32 %v571, %v677
    %v679 = vsub.f32 1.0, %v678
    %v680 = vmul.f32 %v677, %v679
    %v681 = vadd.f32 %v677, %v680
    %vm682 = vweird.f32 %v571
    %vm683 = vweird.f32 %v677
    %vm684 = vmor %vm682, %vm683
    %v685 = vsel %vm684, %v677, %v681
    %v686 = vand.u32 2147483647, %v571
    %vm687 = vcmp.eq.f32.partialorder %v686, 8.507059e+37
    %v688 = vand.u32 %v571, 2147483648
    %v689 = vor.u32 1.1754944e-38, %v688
    %v690 = vsel %vm687, %v689, %v685
    %v691 = vmul.f32 %v547, %v690
    %692 = vrot.lane.b32.xlu0 %v138, 112
    %v693 = vpop.permute.xlu0 %692
    %v696 = vsel %vm286, %v586, 0
    %698 = vmatpush.msra.mxu0 0.0
    %699 = vmatpush.msra.mxu0 0.0
    %700 = vmatpush.msra.mxu0 0.0
    %701 = vmatpush.msra.mxu0 0.0
    %702 = vmatpush.msra.mxu0 0.0
    %703 = vmatpush.msra.mxu0 0.0
    %704 = vmatpush.msra.mxu0 0.0
    %705 = vmatpush.msra.mxu0 0.0
    %706 = vmatpush.msra.mxu0 0.0
    %707 = vmatpush.msra.mxu0 0.0
    %708 = vmatpush.msra.mxu0 0.0
    %709 = vmatpush.msra.mxu0 0.0
    %710 = vmatpush.msra.mxu0 0.0
    %711 = vmatpush.msra.mxu0 0.0
    %712 = vmatpush.msra.mxu0 0.0
    %713 = vmatpush.msra.mxu0 %v693
    %714 = vmatmul.f32.gmra.mxu0 %v696
    %v715 = vpop.f32.mrf.mxu0
    %v716 = vadd.f32 0.0, %v715
    %717 = vdwg.mxu0
    %718 = vrot.lane.b32.xlu0 %v158, 112
    %v719 = vpop.permute.xlu0 %718
    %v722 = vsel %vm286, %v601, 0
    %724 = vmatpush.msra.mxu0 0.0
    %725 = vmatpush.msra.mxu0 0.0
    %726 = vmatpush.msra.mxu0 0.0
    %727 = vmatpush.msra.mxu0 0.0
    %728 = vmatpush.msra.mxu0 0.0
    %729 = vmatpush.msra.mxu0 0.0
    %730 = vmatpush.msra.mxu0 0.0
    %731 = vmatpush.msra.mxu0 0.0
    %732 = vmatpush.msra.mxu0 0.0
    %733 = vmatpush.msra.mxu0 0.0
    %734 = vmatpush.msra.mxu0 0.0
    %735 = vmatpush.msra.mxu0 0.0
    %736 = vmatpush.msra.mxu0 0.0
    %737 = vmatpush.msra.mxu0 0.0
    %738 = vmatpush.msra.mxu0 0.0
    %739 = vmatpush.msra.mxu0 %v719
    %740 = vmatmul.f32.gmra.mxu0 %v722
    %v741 = vpop.f32.mrf.mxu0
    %v742 = vadd.f32 0.0, %v741
    %743 = vdwg.mxu0
    %744 = vrot.lane.b32.xlu0 %v178, 112
    %v745 = vpop.permute.xlu0 %744
    %v748 = vsel %vm286, %v616, 0
    %750 = vmatpush.msra.mxu0 0.0
    %751 = vmatpush.msra.mxu0 0.0
    %752 = vmatpush.msra.mxu0 0.0
    %753 = vmatpush.msra.mxu0 0.0
    %754 = vmatpush.msra.mxu0 0.0
    %755 = vmatpush.msra.mxu0 0.0
    %756 = vmatpush.msra.mxu0 0.0
    %757 = vmatpush.msra.mxu0 0.0
    %758 = vmatpush.msra.mxu0 0.0
    %759 = vmatpush.msra.mxu0 0.0
    %760 = vmatpush.msra.mxu0 0.0
    %761 = vmatpush.msra.mxu0 0.0
    %762 = vmatpush.msra.mxu0 0.0
    %763 = vmatpush.msra.mxu0 0.0
    %764 = vmatpush.msra.mxu0 0.0
    %765 = vmatpush.msra.mxu0 %v745
    %766 = vmatmul.f32.gmra.mxu0 %v748
    %v767 = vpop.f32.mrf.mxu0
    %v768 = vadd.f32 0.0, %v767
    %769 = vdwg.mxu0
    %770 = vrot.lane.b32.xlu0 %v198, 112
    %v771 = vpop.permute.xlu0 %770
    %v774 = vsel %vm286, %v631, 0
    %776 = vmatpush.msra.mxu0 0.0
    %777 = vmatpush.msra.mxu0 0.0
    %778 = vmatpush.msra.mxu0 0.0
    %779 = vmatpush.msra.mxu0 0.0
    %780 = vmatpush.msra.mxu0 0.0
    %781 = vmatpush.msra.mxu0 0.0
    %782 = vmatpush.msra.mxu0 0.0
    %783 = vmatpush.msra.mxu0 0.0
    %784 = vmatpush.msra.mxu0 0.0
    %785 = vmatpush.msra.mxu0 0.0
    %786 = vmatpush.msra.mxu0 0.0
    %787 = vmatpush.msra.mxu0 0.0
    %788 = vmatpush.msra.mxu0 0.0
    %789 = vmatpush.msra.mxu0 0.0
    %790 = vmatpush.msra.mxu0 0.0
    %791 = vmatpush.msra.mxu0 %v771
    %792 = vmatmul.f32.gmra.mxu0 %v774
    %v793 = vpop.f32.mrf.mxu0
    %v794 = vadd.f32 0.0, %v793
    %795 = vdwg.mxu0
    %796 = vrot.lane.b32.xlu0 %v221, 112
    %v797 = vpop.permute.xlu0 %796
    %v800 = vsel %vm286, %v646, 0
    %802 = vmatpush.msra.mxu0 0.0
    %803 = vmatpush.msra.mxu0 0.0
    %804 = vmatpush.msra.mxu0 0.0
    %805 = vmatpush.msra.mxu0 0.0
    %806 = vmatpush.msra.mxu0 0.0
    %807 = vmatpush.msra.mxu0 0.0
    %808 = vmatpush.msra.mxu0 0.0
    %809 = vmatpush.msra.mxu0 0.0
    %810 = vmatpush.msra.mxu0 0.0
    %811 = vmatpush.msra.mxu0 0.0
    %812 = vmatpush.msra.mxu0 0.0
    %813 = vmatpush.msra.mxu0 0.0
    %814 = vmatpush.msra.mxu0 0.0
    %815 = vmatpush.msra.mxu0 0.0
    %816 = vmatpush.msra.mxu0 0.0
    %817 = vmatpush.msra.mxu0 %v797
    %818 = vmatmul.f32.gmra.mxu0 %v800
    %v819 = vpop.f32.mrf.mxu0
    %v820 = vadd.f32 0.0, %v819
    %821 = vdwg.mxu0
    %822 = vrot.lane.b32.xlu0 %v241, 112
    %v823 = vpop.permute.xlu0 %822
    %v826 = vsel %vm286, %v661, 0
    %828 = vmatpush.msra.mxu0 0.0
    %829 = vmatpush.msra.mxu0 0.0
    %830 = vmatpush.msra.mxu0 0.0
    %831 = vmatpush.msra.mxu0 0.0
    %832 = vmatpush.msra.mxu0 0.0
    %833 = vmatpush.msra.mxu0 0.0
    %834 = vmatpush.msra.mxu0 0.0
    %835 = vmatpush.msra.mxu0 0.0
    %836 = vmatpush.msra.mxu0 0.0
    %837 = vmatpush.msra.mxu0 0.0
    %838 = vmatpush.msra.mxu0 0.0
    %839 = vmatpush.msra.mxu0 0.0
    %840 = vmatpush.msra.mxu0 0.0
    %841 = vmatpush.msra.mxu0 0.0
    %842 = vmatpush.msra.mxu0 0.0
    %843 = vmatpush.msra.mxu0 %v823
    %844 = vmatmul.f32.gmra.mxu0 %v826
    %v845 = vpop.f32.mrf.mxu0
    %v846 = vadd.f32 0.0, %v845
    %847 = vdwg.mxu0
    %848 = vrot.lane.b32.xlu0 %v261, 112
    %v849 = vpop.permute.xlu0 %848
    %v852 = vsel %vm286, %v676, 0
    %854 = vmatpush.msra.mxu0 0.0
    %855 = vmatpush.msra.mxu0 0.0
    %856 = vmatpush.msra.mxu0 0.0
    %857 = vmatpush.msra.mxu0 0.0
    %858 = vmatpush.msra.mxu0 0.0
    %859 = vmatpush.msra.mxu0 0.0
    %860 = vmatpush.msra.mxu0 0.0
    %861 = vmatpush.msra.mxu0 0.0
    %862 = vmatpush.msra.mxu0 0.0
    %863 = vmatpush.msra.mxu0 0.0
    %864 = vmatpush.msra.mxu0 0.0
    %865 = vmatpush.msra.mxu0 0.0
    %866 = vmatpush.msra.mxu0 0.0
    %867 = vmatpush.msra.mxu0 0.0
    %868 = vmatpush.msra.mxu0 0.0
    %869 = vmatpush.msra.mxu0 %v849
    %870 = vmatmul.f32.gmra.mxu0 %v852
    %v871 = vpop.f32.mrf.mxu0
    %v872 = vadd.f32 0.0, %v871
    %873 = vdwg.mxu0
    %874 = vrot.lane.b32.xlu0 %v281, 112
    %v875 = vpop.permute.xlu0 %874
    %v878 = vsel %vm286, %v691, 0
    %880 = vmatpush.msra.mxu0 0.0
    %881 = vmatpush.msra.mxu0 0.0
    %882 = vmatpush.msra.mxu0 0.0
    %883 = vmatpush.msra.mxu0 0.0
    %884 = vmatpush.msra.mxu0 0.0
    %885 = vmatpush.msra.mxu0 0.0
    %886 = vmatpush.msra.mxu0 0.0
    %887 = vmatpush.msra.mxu0 0.0
    %888 = vmatpush.msra.mxu0 0.0
    %889 = vmatpush.msra.mxu0 0.0
    %890 = vmatpush.msra.mxu0 0.0
    %891 = vmatpush.msra.mxu0 0.0
    %892 = vmatpush.msra.mxu0 0.0
    %893 = vmatpush.msra.mxu0 0.0
    %894 = vmatpush.msra.mxu0 0.0
    %895 = vmatpush.msra.mxu0 %v875
    %896 = vmatmul.f32.gmra.mxu0 %v878
    %v897 = vpop.f32.mrf.mxu0
    %v898 = vadd.f32 0.0, %v897
    %899 = vdwg.mxu0
    %v900 = vld [vmem:[%s3] sm:$0xff]
    %v901 = vld [vmem:[%s3 + $0x8] sm:$0xff]
    %v902 = vld [vmem:[%s3 + $0x10] sm:$0xff]
    %v903 = vld [vmem:[%s3 + $0x18] sm:$0xff]
    %v904 = vld [vmem:[%s3 + $0x20] sm:$0xff]
    %v905 = vld [vmem:[%s3 + $0x28] sm:$0xff]
    %v906 = vld [vmem:[%s3 + $0x30] sm:$0xff]
    %v907 = vld [vmem:[%s3 + $0x38] sm:$0xff]
    %v909 = vsel %vm286, %v716, 0
    %911 = vmatpush.msra.mxu0 0.0
    %912 = vmatpush.msra.mxu0 0.0
    %913 = vmatpush.msra.mxu0 0.0
    %914 = vmatpush.msra.mxu0 0.0
    %915 = vmatpush.msra.mxu0 0.0
    %916 = vmatpush.msra.mxu0 0.0
    %917 = vmatpush.msra.mxu0 0.0
    %918 = vmatpush.msra.mxu0 0.0
    %919 = vmatpush.msra.mxu0 0.0
    %920 = vmatpush.msra.mxu0 0.0
    %921 = vmatpush.msra.mxu0 0.0
    %922 = vmatpush.msra.mxu0 0.0
    %923 = vmatpush.msra.mxu0 0.0
    %924 = vmatpush.msra.mxu0 0.0
    %925 = vmatpush.msra.mxu0 0.0
    %926 = vmatpush.msra.mxu0 %v900
    %927 = vmatmul.f32.gmra.mxu0 %v909
    %v928 = vpop.f32.mrf.mxu0
    %v929 = vadd.f32 0.0, %v928
    %930 = vdwg.mxu0
    %v932 = vsel %vm286, %v742, 0
    %934 = vmatpush.msra.mxu0 0.0
    %935 = vmatpush.msra.mxu0 0.0
    %936 = vmatpush.msra.mxu0 0.0
    %937 = vmatpush.msra.mxu0 0.0
    %938 = vmatpush.msra.mxu0 0.0
    %939 = vmatpush.msra.mxu0 0.0
    %940 = vmatpush.msra.mxu0 0.0
    %941 = vmatpush.msra.mxu0 0.0
    %942 = vmatpush.msra.mxu0 0.0
    %943 = vmatpush.msra.mxu0 0.0
    %944 = vmatpush.msra.mxu0 0.0
    %945 = vmatpush.msra.mxu0 0.0
    %946 = vmatpush.msra.mxu0 0.0
    %947 = vmatpush.msra.mxu0 0.0
    %948 = vmatpush.msra.mxu0 0.0
    %949 = vmatpush.msra.mxu0 %v901
    %950 = vmatmul.f32.gmra.mxu0 %v932
    %v951 = vpop.f32.mrf.mxu0
    %v952 = vadd.f32 0.0, %v951
    %953 = vdwg.mxu0
    %v955 = vsel %vm286, %v768, 0
    %957 = vmatpush.msra.mxu0 0.0
    %958 = vmatpush.msra.mxu0 0.0
    %959 = vmatpush.msra.mxu0 0.0
    %960 = vmatpush.msra.mxu0 0.0
    %961 = vmatpush.msra.mxu0 0.0
    %962 = vmatpush.msra.mxu0 0.0
    %963 = vmatpush.msra.mxu0 0.0
    %964 = vmatpush.msra.mxu0 0.0
    %965 = vmatpush.msra.mxu0 0.0
    %966 = vmatpush.msra.mxu0 0.0
    %967 = vmatpush.msra.mxu0 0.0
    %968 = vmatpush.msra.mxu0 0.0
    %969 = vmatpush.msra.mxu0 0.0
    %970 = vmatpush.msra.mxu0 0.0
    %971 = vmatpush.msra.mxu0 0.0
    %972 = vmatpush.msra.mxu0 %v902
    %973 = vmatmul.f32.gmra.mxu0 %v955
    %v974 = vpop.f32.mrf.mxu0
    %v975 = vadd.f32 0.0, %v974
    %976 = vdwg.mxu0
    %v978 = vsel %vm286, %v794, 0
    %980 = vmatpush.msra.mxu0 0.0
    %981 = vmatpush.msra.mxu0 0.0
    %982 = vmatpush.msra.mxu0 0.0
    %983 = vmatpush.msra.mxu0 0.0
    %984 = vmatpush.msra.mxu0 0.0
    %985 = vmatpush.msra.mxu0 0.0
    %986 = vmatpush.msra.mxu0 0.0
    %987 = vmatpush.msra.mxu0 0.0
    %988 = vmatpush.msra.mxu0 0.0
    %989 = vmatpush.msra.mxu0 0.0
    %990 = vmatpush.msra.mxu0 0.0
    %991 = vmatpush.msra.mxu0 0.0
    %992 = vmatpush.msra.mxu0 0.0
    %993 = vmatpush.msra.mxu0 0.0
    %994 = vmatpush.msra.mxu0 0.0
    %995 = vmatpush.msra.mxu0 %v903
    %996 = vmatmul.f32.gmra.mxu0 %v978
    %v997 = vpop.f32.mrf.mxu0
    %v998 = vadd.f32 0.0, %v997
    %999 = vdwg.mxu0
    %v1001 = vsel %vm286, %v820, 0
    %1003 = vmatpush.msra.mxu0 0.0
    %1004 = vmatpush.msra.mxu0 0.0
    %1005 = vmatpush.msra.mxu0 0.0
    %1006 = vmatpush.msra.mxu0 0.0
    %1007 = vmatpush.msra.mxu0 0.0
    %1008 = vmatpush.msra.mxu0 0.0
    %1009 = vmatpush.msra.mxu0 0.0
    %1010 = vmatpush.msra.mxu0 0.0
    %1011 = vmatpush.msra.mxu0 0.0
    %1012 = vmatpush.msra.mxu0 0.0
    %1013 = vmatpush.msra.mxu0 0.0
    %1014 = vmatpush.msra.mxu0 0.0
    %1015 = vmatpush.msra.mxu0 0.0
    %1016 = vmatpush.msra.mxu0 0.0
    %1017 = vmatpush.msra.mxu0 0.0
    %1018 = vmatpush.msra.mxu0 %v904
    %1019 = vmatmul.f32.gmra.mxu0 %v1001
    %v1020 = vpop.f32.mrf.mxu0
    %v1021 = vadd.f32 0.0, %v1020
    %1022 = vdwg.mxu0
    %v1024 = vsel %vm286, %v846, 0
    %1026 = vmatpush.msra.mxu0 0.0
    %1027 = vmatpush.msra.mxu0 0.0
    %1028 = vmatpush.msra.mxu0 0.0
    %1029 = vmatpush.msra.mxu0 0.0
    %1030 = vmatpush.msra.mxu0 0.0
    %1031 = vmatpush.msra.mxu0 0.0
    %1032 = vmatpush.msra.mxu0 0.0
    %1033 = vmatpush.msra.mxu0 0.0
    %1034 = vmatpush.msra.mxu0 0.0
    %1035 = vmatpush.msra.mxu0 0.0
    %1036 = vmatpush.msra.mxu0 0.0
    %1037 = vmatpush.msra.mxu0 0.0
    %1038 = vmatpush.msra.mxu0 0.0
    %1039 = vmatpush.msra.mxu0 0.0
    %1040 = vmatpush.msra.mxu0 0.0
    %1041 = vmatpush.msra.mxu0 %v905
    %1042 = vmatmul.f32.gmra.mxu0 %v1024
    %v1043 = vpop.f32.mrf.mxu0
    %v1044 = vadd.f32 0.0, %v1043
    %1045 = vdwg.mxu0
    %v1047 = vsel %vm286, %v872, 0
    %1049 = vmatpush.msra.mxu0 0.0
    %1050 = vmatpush.msra.mxu0 0.0
    %1051 = vmatpush.msra.mxu0 0.0
    %1052 = vmatpush.msra.mxu0 0.0
    %1053 = vmatpush.msra.mxu0 0.0
    %1054 = vmatpush.msra.mxu0 0.0
    %1055 = vmatpush.msra.mxu0 0.0
    %1056 = vmatpush.msra.mxu0 0.0
    %1057 = vmatpush.msra.mxu0 0.0
    %1058 = vmatpush.msra.mxu0 0.0
    %1059 = vmatpush.msra.mxu0 0.0
    %1060 = vmatpush.msra.mxu0 0.0
    %1061 = vmatpush.msra.mxu0 0.0
    %1062 = vmatpush.msra.mxu0 0.0
    %1063 = vmatpush.msra.mxu0 0.0
    %1064 = vmatpush.msra.mxu0 %v906
    %1065 = vmatmul.f32.gmra.mxu0 %v1047
    %v1066 = vpop.f32.mrf.mxu0
    %v1067 = vadd.f32 0.0, %v1066
    %1068 = vdwg.mxu0
    %v1070 = vsel %vm286, %v898, 0
    %1072 = vmatpush.msra.mxu0 0.0
    %1073 = vmatpush.msra.mxu0 0.0
    %1074 = vmatpush.msra.mxu0 0.0
    %1075 = vmatpush.msra.mxu0 0.0
    %1076 = vmatpush.msra.mxu0 0.0
    %1077 = vmatpush.msra.mxu0 0.0
    %1078 = vmatpush.msra.mxu0 0.0
    %1079 = vmatpush.msra.mxu0 0.0
    %1080 = vmatpush.msra.mxu0 0.0
    %1081 = vmatpush.msra.mxu0 0.0
    %1082 = vmatpush.msra.mxu0 0.0
    %1083 = vmatpush.msra.mxu0 0.0
    %1084 = vmatpush.msra.mxu0 0.0
    %1085 = vmatpush.msra.mxu0 0.0
    %1086 = vmatpush.msra.mxu0 0.0
    %1087 = vmatpush.msra.mxu0 %v907
    %1088 = vmatmul.f32.gmra.mxu0 %v1070
    %v1089 = vpop.f32.mrf.mxu0
    %v1090 = vadd.f32 0.0, %v1089
    %1091 = vdwg.mxu0
    %v1092 = vsel %vm27, %v929, 0.0
    %v1093 = vsel %vm27, %v952, 0.0
    %v1094 = vadd.f32 %v1092, %v1093
    %v1095 = vsel %vm27, %v975, 0.0
    %v1096 = vadd.f32 %v1094, %v1095
    %v1097 = vsel %vm27, %v998, 0.0
    %v1098 = vadd.f32 %v1096, %v1097
    %v1099 = vsel %vm27, %v1021, 0.0
    %v1100 = vsel %vm27, %v1044, 0.0
    %v1101 = vadd.f32 %v1099, %v1100
    %v1102 = vsel %vm27, %v1067, 0.0
    %v1103 = vadd.f32 %v1101, %v1102
    %v1104 = vsel %vm27, %v1090, 0.0
    %v1105 = vadd.f32 %v1103, %v1104
    %v1106 = vadd.f32 %v24, %v1098
    %v1107 = vadd.f32 %v25, %v1105
    %v1108 = vperm.slane %v26, 2
    %v1109 = vadd.f32 %v1106, %v1108
    %v1110 = vadd.f32 %v1107, %v1108
    %v1111 = vsel %vm27, %v1109, 0.0
    %1112 = vadd.xlane.f32.xlu0 %v1111
    %v1113 = vpop.xlane.xlu0 %1112
    %v1114 = vsel %vm27, %v1110, 0.0
    %1115 = vadd.xlane.f32.xlu0 %v1114
    %v1116 = vpop.xlane.xlu0 %1115
    %v1117 = vmul.f32 %v1113, %v40
    %v1118 = vmul.f32 %v1116, %v40
    %v1119 = vsub.f32 %v1109, %v1117
    %v1120 = vsub.f32 %v1110, %v1118
    %v1121 = vmul.f32 %v1119, %v1119
    %v1122 = vmul.f32 %v1120, %v1120
    %v1123 = vsel %vm27, %v1121, 0.0
    %1124 = vadd.xlane.f32.xlu0 %v1123
    %v1125 = vpop.xlane.xlu0 %1124
    %v1126 = vsel %vm27, %v1122, 0.0
    %1127 = vadd.xlane.f32.xlu0 %v1126
    %v1128 = vpop.xlane.xlu0 %1127
    %v1129 = vmul.f32 %v1125, %v40
    %v1130 = vmul.f32 %v1128, %v40
    %v1131 = vadd.f32 %v1129, 1e-05
    %v1132 = vadd.f32 %v1130, 1e-05
    %v1133 = vrsqrt.pop %v1131
    %v1134 = vmul.f32 %v1133, %v1131
    %v1135 = vmul.f32 %v1134, %v1133
    %v1136 = vmul.f32 0.5, %v1135
    %v1137 = vsub.f32 1.5, %v1136
    %v1138 = vmul.f32 %v1133, %v1137
    %vm1139 = vweird.f32 %v1131
    %vm1140 = vweird.f32 %v1133
    %vm1141 = vmor %vm1139, %vm1140
    %v1142 = vsel %vm1141, %v1133, %v1138
    %v1143 = vrsqrt.pop %v1132
    %v1144 = vmul.f32 %v1143, %v1132
    %v1145 = vmul.f32 %v1144, %v1143
    %v1146 = vmul.f32 0.5, %v1145
    %v1147 = vsub.f32 1.5, %v1146
    %v1148 = vmul.f32 %v1143, %v1147
    %vm1149 = vweird.f32 %v1132
    %vm1150 = vweird.f32 %v1143
    %vm1151 = vmor %vm1149, %vm1150
    %v1152 = vsel %vm1151, %v1143, %v1148
    %v1153 = vmul.f32 %v1119, %v1142
    %v1154 = vmul.f32 %v1120, %v1152
    %v1155 = vperm.slane %v26, 3
    %v1156 = vmul.f32 %v1153, %v1155
    %v1157 = vmul.f32 %v1154, %v1155
    %v1158 = vperm.slane %v26, 4
    %v1159 = vadd.f32 %v1156, %v1158
    %v1160 = vadd.f32 %v1157, %v1158
    %v1161 = vld [vmem:[%s4] sm:$0xff]
    %v1162 = vld [vmem:[%s4 + $0x8] sm:$0xff]
    %v1163 = vld [vmem:[%s4 + $0x10] sm:$0xff]
    %v1164 = vld [vmem:[%s4 + $0x18] sm:$0xff]
    %v1165 = vperm.slane %v26, 6
    %v1167 = vsel %vm27, %v1159, 0
    %v1170 = vsel %vm27, %v1160, 0
    %1172 = vmatpush.msra.mxu0 0.0
    %1173 = vmatpush.msra.mxu0 0.0
    %1174 = vmatpush.msra.mxu0 0.0
    %1175 = vmatpush.msra.mxu0 0.0
    %1176 = vmatpush.msra.mxu0 0.0
    %1177 = vmatpush.msra.mxu0 0.0
    %1178 = vmatpush.msra.mxu0 0.0
    %1179 = vmatpush.msra.mxu0 0.0
    %1180 = vmatpush.msra.mxu0 0.0
    %1181 = vmatpush.msra.mxu0 0.0
    %1182 = vmatpush.msra.mxu0 0.0
    %1183 = vmatpush.msra.mxu0 0.0
    %1184 = vmatpush.msra.mxu0 %v1164
    %1185 = vmatpush.msra.mxu0 %v1163
    %1186 = vmatpush.msra.mxu0 %v1162
    %1187 = vmatpush.msra.mxu0 %v1161
    %1188 = vmatmul.f32.gmra.mxu0 %v1167
    %v1189 = vpop.f32.mrf.mxu0
    %v1190 = vadd.f32 %v1165, %v1189
    %1191 = vmatmul.f32.gmra.mxu0 %v1170
    %v1192 = vpop.f32.mrf.mxu0
    %v1193 = vadd.f32 %v1165, %v1192
    %1194 = vdwg.mxu0
    %v1195 = vmul.f32 %v1190, 0.5
    %v1196 = vmul.f32 %v1193, 0.5
    %v1197 = vmul.f32 %v1190, 0.70710677
    %v1198 = vmul.f32 %v1193, 0.70710677
    %v1199 = vmul.f32 %v1197, %v1197
    %v1200 = vmin.f32 16.0, %v1199
    %v1201 = vmul.f32 %v1200, 2.1237322e-06
    %v1202 = vadd.f32 %v1201, 0.00028619796
    %v1203 = vmul.f32 %v1200, %v1202
    %v1204 = vadd.f32 %v1203, 0.0036580483
    %v1205 = vmul.f32 %v1200, %v1204
    %v1206 = vadd.f32 %v1205, 0.05243302
    %v1207 = vmul.f32 %v1200, %v1206
    %v1208 = vadd.f32 %v1207, 0.18741608
    %v1209 = vmul.f32 %v1200, %v1208
    %v1210 = vadd.f32 %v1209, 1.1283791
    %v1211 = vmul.f32 %v1197, %v1210
    %v1212 = vmul.f32 %v1200, 3.8918573e-05
    %v1213 = vadd.f32 %v1212, 0.001143296
    %v1214 = vmul.f32 %v1200, %v1213
    %v1215 = vadd.f32 %v1214, 0.014752088
    %v1216 = vmul.f32 %v1200, %v1215
    %v1217 = vadd.f32 %v1216, 0.112945676
    %v1218 = vmul.f32 %v1200, %v1217
    %v1219 = vadd.f32 %v1218, 0.4994258
    %v1220 = vmul.f32 %v1200, %v1219
    %v1221 = vadd.f32 %v1220, 1.0
    %v1222 = vrcp.pop %v1221
    %v1223 = vmul.f32 %v1221, %v1222
    %v1224 = vsub.f32 1.0, %v1223
    %v1225 = vmul.f32 %v1222, %v1224
    %v1226 = vadd.f32 %v1222, %v1225
    %vm1227 = vweird.f32 %v1221
    %vm1228 = vweird.f32 %v1222
    %vm1229 = vmor %vm1227, %vm1228
    %v1230 = vsel %vm1229, %v1222, %v1226
    %v1231 = vand.u32 2147483647, %v1221
    %vm1232 = vcmp.eq.f32.partialorder %v1231, 8.507059e+37
    %v1233 = vand.u32 %v1221, 2147483648
    %v1234 = vor.u32 1.1754944e-38, %v1233
    %v1235 = vsel %vm1232, %v1234, %v1230
    %v1236 = vmul.f32 %v1211, %v1235
    %v1237 = vmin.f32 %v1236, 1.0
    %v1238 = vmax.f32 %v1237, -1.0
    %v1239 = vmul.f32 %v1198, %v1198
    %v1240 = vmin.f32 16.0, %v1239
    %v1241 = vmul.f32 %v1240, 2.1237322e-06
    %v1242 = vadd.f32 %v1241, 0.00028619796
    %v1243 = vmul.f32 %v1240, %v1242
    %v1244 = vadd.f32 %v1243, 0.0036580483
    %v1245 = vmul.f32 %v1240, %v1244
    %v1246 = vadd.f32 %v1245, 0.05243302
    %v1247 = vmul.f32 %v1240, %v1246
    %v1248 = vadd.f32 %v1247, 0.18741608
    %v1249 = vmul.f32 %v1240, %v1248
    %v1250 = vadd.f32 %v1249, 1.1283791
    %v1251 = vmul.f32 %v1198, %v1250
    %v1252 = vmul.f32 %v1240, 3.8918573e-05
    %v1253 = vadd.f32 %v1252, 0.001143296
    %v1254 = vmul.f32 %v1240, %v1253
    %v1255 = vadd.f32 %v1254, 0.014752088
    %v1256 = vmul.f32 %v1240, %v1255
    %v1257 = vadd.f32 %v1256, 0.112945676
    %v1258 = vmul.f32 %v1240, %v1257
    %v1259 = vadd.f32 %v1258, 0.4994258
    %v1260 = vmul.f32 %v1240, %v1259
    %v1261 = vadd.f32 %v1260, 1.0
    %v1262 = vrcp.pop %v1261
    %v1263 = vmul.f32 %v1261, %v1262
    %v1264 = vsub.f32 1.0, %v1263
    %v1265 = vmul.f32 %v1262, %v1264
    %v1266 = vadd.f32 %v1262, %v1265
    %vm1267 = vweird.f32 %v1261
    %vm1268 = vweird.f32 %v1262
    %vm1269 = vmor %vm1267, %vm1268
    %v1270 = vsel %vm1269, %v1262, %v1266
    %v1271 = vand.u32 2147483647, %v1261
    %vm1272 = vcmp.eq.f32.partialorder %v1271, 8.507059e+37
    %v1273 = vand.u32 %v1261, 2147483648
    %v1274 = vor.u32 1.1754944e-38, %v1273
    %v1275 = vsel %vm1272, %v1274, %v1270
    %v1276 = vmul.f32 %v1251, %v1275
    %v1277 = vmin.f32 %v1276, 1.0
    %v1278 = vmax.f32 %v1277, -1.0
    %v1279 = vadd.f32 %v1238, 1.0
    %v1280 = vadd.f32 %v1278, 1.0
    %v1281 = vmul.f32 %v1195, %v1279
    %v1282 = vmul.f32 %v1196, %v1280
    %v1283 = vld [vmem:[%s5] sm:$0xff]
    %v1284 = vld [vmem:[%s5 + $0x8] sm:$0xff]
    %v1285 = vld [vmem:[%s5 + $0x10] sm:$0xff]
    %v1286 = vld [vmem:[%s5 + $0x18] sm:$0xff]
    %v1287 = vld [vmem:[%s5 + $0x20] sm:$0xff]
    %v1288 = vld [vmem:[%s5 + $0x28] sm:$0xff]
    %v1289 = vld [vmem:[%s5 + $0x30] sm:$0xff]
    %v1290 = vld [vmem:[%s5 + $0x38] sm:$0xff]
    %v1291 = vld [vmem:[%s5 + $0x40] sm:$0xff]
    %v1292 = vld [vmem:[%s5 + $0x48] sm:$0xff]
    %v1293 = vld [vmem:[%s5 + $0x50] sm:$0xff]
    %v1294 = vld [vmem:[%s5 + $0x58] sm:$0xff]
    %v1295 = vld [vmem:[%s5 + $0x60] sm:$0xff]
    %v1296 = vld [vmem:[%s5 + $0x68] sm:$0xff]
    %v1297 = vld [vmem:[%s5 + $0x70] sm:$0xff]
    %v1298 = vld [vmem:[%s5 + $0x78] sm:$0xff]
    %v1299 = vperm.slane %v26, 5
    %1300 = vmatpush.msra.mxu0 %v1298
    %1301 = vmatpush.msra.mxu0 %v1297
    %1302 = vmatpush.msra.mxu0 %v1296
    %1303 = vmatpush.msra.mxu0 %v1295
    %1304 = vmatpush.msra.mxu0 %v1294
    %1305 = vmatpush.msra.mxu0 %v1293
    %1306 = vmatpush.msra.mxu0 %v1292
    %1307 = vmatpush.msra.mxu0 %v1291
    %1308 = vmatpush.msra.mxu0 %v1290
    %1309 = vmatpush.msra.mxu0 %v1289
    %1310 = vmatpush.msra.mxu0 %v1288
    %1311 = vmatpush.msra.mxu0 %v1287
    %1312 = vmatpush.msra.mxu0 %v1286
    %1313 = vmatpush.msra.mxu0 %v1285
    %1314 = vmatpush.msra.mxu0 %v1284
    %1315 = vmatpush.msra.mxu0 %v1283
    %1316 = vmatmul.f32.gmra.mxu0 %v1281
    %v1317 = vpop.f32.mrf.mxu0
    %v1318 = vadd.f32 %v1299, %v1317
    %1319 = vmatmul.f32.gmra.mxu0 %v1282
    %v1320 = vpop.f32.mrf.mxu0
    %v1321 = vadd.f32 %v1299, %v1320
    %1322 = vdwg.mxu0
    %v1323 = vadd.f32 %v1109, %v1318
    %v1324 = vadd.f32 %v1110, %v1321
    %s1325 = scalar_lea.vmem %s1, 8
    %v1326 = vld [vmem:[%s1325] sm:$0xff]
    %v1327 = vsel %vm27, %v1323, 0.0
    %1328 = vadd.xlane.f32.xlu0 %v1327
    %v1329 = vpop.xlane.xlu0 %1328
    %v1330 = vsel %vm27, %v1324, 0.0
    %1331 = vadd.xlane.f32.xlu0 %v1330
    %v1332 = vpop.xlane.xlu0 %1331
    %v1333 = vmul.f32 %v1329, %v40
    %v1334 = vmul.f32 %v1332, %v40
    %v1335 = vsub.f32 %v1323, %v1333
    %v1336 = vsub.f32 %v1324, %v1334
    %v1337 = vmul.f32 %v1335, %v1335
    %v1338 = vmul.f32 %v1336, %v1336
    %v1339 = vsel %vm27, %v1337, 0.0
    %1340 = vadd.xlane.f32.xlu0 %v1339
    %v1341 = vpop.xlane.xlu0 %1340
    %v1342 = vsel %vm27, %v1338, 0.0
    %1343 = vadd.xlane.f32.xlu0 %v1342
    %v1344 = vpop.xlane.xlu0 %1343
    %v1345 = vmul.f32 %v1341, %v40
    %v1346 = vmul.f32 %v1344, %v40
    %v1347 = vadd.f32 %v1345, 1e-05
    %v1348 = vadd.f32 %v1346, 1e-05
    %v1349 = vrsqrt.pop %v1347
    %v1350 = vmul.f32 %v1349, %v1347
    %v1351 = vmul.f32 %v1350, %v1349
    %v1352 = vmul.f32 0.5, %v1351
    %v1353 = vsub.f32 1.5, %v1352
    %v1354 = vmul.f32 %v1349, %v1353
    %vm1355 = vweird.f32 %v1347
    %vm1356 = vweird.f32 %v1349
    %vm1357 = vmor %vm1355, %vm1356
    %v1358 = vsel %vm1357, %v1349, %v1354
    %v1359 = vrsqrt.pop %v1348
    %v1360 = vmul.f32 %v1359, %v1348
    %v1361 = vmul.f32 %v1360, %v1359
    %v1362 = vmul.f32 0.5, %v1361
    %v1363 = vsub.f32 1.5, %v1362
    %v1364 = vmul.f32 %v1359, %v1363
    %vm1365 = vweird.f32 %v1348
    %vm1366 = vweird.f32 %v1359
    %vm1367 = vmor %vm1365, %vm1366
    %v1368 = vsel %vm1367, %v1359, %v1364
    %v1369 = vmul.f32 %v1335, %v1358
    %v1370 = vmul.f32 %v1336, %v1368
    %v1371 = vperm.slane %v1326, 0
    %v1372 = vmul.f32 %v1369, %v1371
    %v1373 = vmul.f32 %v1370, %v1371
    %v1374 = vperm.slane %v1326, 1
    %v1375 = vadd.f32 %v1372, %v1374
    %v1376 = vadd.f32 %v1373, %v1374
    %s1377 = scalar_lea.vmem %s2, 256
    %v1378 = vld [vmem:[%s1377] sm:$0xff]
    %v1379 = vld [vmem:[%s1377 + $0x8] sm:$0xff]
    %v1380 = vld [vmem:[%s1377 + $0x10] sm:$0xff]
    %v1381 = vld [vmem:[%s1377 + $0x18] sm:$0xff]
    %v1382 = vld [vmem:[%s1377 + $0x20] sm:$0xff]
    %v1383 = vld [vmem:[%s1377 + $0x28] sm:$0xff]
    %v1384 = vld [vmem:[%s1377 + $0x30] sm:$0xff]
    %v1385 = vld [vmem:[%s1377 + $0x38] sm:$0xff]
    %v1386 = vld [vmem:[%s1377 + $0x40] sm:$0xff]
    %v1387 = vld [vmem:[%s1377 + $0x48] sm:$0xff]
    %v1388 = vld [vmem:[%s1377 + $0x50] sm:$0xff]
    %v1389 = vld [vmem:[%s1377 + $0x58] sm:$0xff]
    %v1390 = vld [vmem:[%s1377 + $0x60] sm:$0xff]
    %v1391 = vld [vmem:[%s1377 + $0x68] sm:$0xff]
    %v1392 = vld [vmem:[%s1377 + $0x70] sm:$0xff]
    %v1393 = vld [vmem:[%s1377 + $0x78] sm:$0xff]
    %v1394 = vld [vmem:[%s1377 + $0x80] sm:$0xff]
    %v1395 = vld [vmem:[%s1377 + $0x88] sm:$0xff]
    %v1396 = vld [vmem:[%s1377 + $0x90] sm:$0xff]
    %v1397 = vld [vmem:[%s1377 + $0x98] sm:$0xff]
    %v1398 = vld [vmem:[%s1377 + $0xa0] sm:$0xff]
    %v1399 = vld [vmem:[%s1377 + $0xa8] sm:$0xff]
    %v1400 = vld [vmem:[%s1377 + $0xb0] sm:$0xff]
    %v1401 = vld [vmem:[%s1377 + $0xb8] sm:$0xff]
    %v1402 = vld [vmem:[%s1377 + $0xc0] sm:$0xff]
    %v1403 = vld [vmem:[%s1377 + $0xc8] sm:$0xff]
    %v1404 = vld [vmem:[%s1377 + $0xd0] sm:$0xff]
    %v1405 = vld [vmem:[%s1377 + $0xd8] sm:$0xff]
    %v1406 = vld [vmem:[%s1377 + $0xe0] sm:$0xff]
    %v1407 = vld [vmem:[%s1377 + $0xe8] sm:$0xff]
    %v1408 = vld [vmem:[%s1377 + $0xf0] sm:$0xff]
    %v1409 = vld [vmem:[%s1377 + $0xf8] sm:$0xff]
    %v1411 = vsel %vm27, %v1375, 0
    %1413 = vmatpush.msra.mxu0 0.0
    %1414 = vmatpush.msra.mxu0 0.0
    %1415 = vmatpush.msra.mxu0 0.0
    %1416 = vmatpush.msra.mxu0 0.0
    %1417 = vmatpush.msra.mxu0 0.0
    %1418 = vmatpush.msra.mxu0 0.0
    %1419 = vmatpush.msra.mxu0 0.0
    %1420 = vmatpush.msra.mxu0 0.0
    %1421 = vmatpush.msra.mxu0 0.0
    %1422 = vmatpush.msra.mxu0 0.0
    %1423 = vmatpush.msra.mxu0 0.0
    %1424 = vmatpush.msra.mxu0 0.0
    %1425 = vmatpush.msra.mxu0 %v1381
    %1426 = vmatpush.msra.mxu0 %v1380
    %1427 = vmatpush.msra.mxu0 %v1379
    %1428 = vmatpush.msra.mxu0 %v1378
    %1429 = vmatmul.f32.gmra.mxu0 %v1411
    %v1430 = vpop.f32.mrf.mxu0
    %v1431 = vadd.f32 0.0, %v1430
    %1432 = vdwg.mxu0
    %1433 = vmatpush.msra.mxu0 0.0
    %1434 = vmatpush.msra.mxu0 0.0
    %1435 = vmatpush.msra.mxu0 0.0
    %1436 = vmatpush.msra.mxu0 0.0
    %1437 = vmatpush.msra.mxu0 0.0
    %1438 = vmatpush.msra.mxu0 0.0
    %1439 = vmatpush.msra.mxu0 0.0
    %1440 = vmatpush.msra.mxu0 0.0
    %1441 = vmatpush.msra.mxu0 0.0
    %1442 = vmatpush.msra.mxu0 0.0
    %1443 = vmatpush.msra.mxu0 0.0
    %1444 = vmatpush.msra.mxu0 0.0
    %1445 = vmatpush.msra.mxu0 %v1385
    %1446 = vmatpush.msra.mxu0 %v1384
    %1447 = vmatpush.msra.mxu0 %v1383
    %1448 = vmatpush.msra.mxu0 %v1382
    %1449 = vmatmul.f32.gmra.mxu0 %v1411
    %v1450 = vpop.f32.mrf.mxu0
    %v1451 = vadd.f32 0.0, %v1450
    %1452 = vdwg.mxu0
    %1453 = vmatpush.msra.mxu0 0.0
    %1454 = vmatpush.msra.mxu0 0.0
    %1455 = vmatpush.msra.mxu0 0.0
    %1456 = vmatpush.msra.mxu0 0.0
    %1457 = vmatpush.msra.mxu0 0.0
    %1458 = vmatpush.msra.mxu0 0.0
    %1459 = vmatpush.msra.mxu0 0.0
    %1460 = vmatpush.msra.mxu0 0.0
    %1461 = vmatpush.msra.mxu0 0.0
    %1462 = vmatpush.msra.mxu0 0.0
    %1463 = vmatpush.msra.mxu0 0.0
    %1464 = vmatpush.msra.mxu0 0.0
    %1465 = vmatpush.msra.mxu0 %v1389
    %1466 = vmatpush.msra.mxu0 %v1388
    %1467 = vmatpush.msra.mxu0 %v1387
    %1468 = vmatpush.msra.mxu0 %v1386
    %1469 = vmatmul.f32.gmra.mxu0 %v1411
    %v1470 = vpop.f32.mrf.mxu0
    %v1471 = vadd.f32 0.0, %v1470
    %1472 = vdwg.mxu0
    %1473 = vmatpush.msra.mxu0 0.0
    %1474 = vmatpush.msra.mxu0 0.0
    %1475 = vmatpush.msra.mxu0 0.0
    %1476 = vmatpush.msra.mxu0 0.0
    %1477 = vmatpush.msra.mxu0 0.0
    %1478 = vmatpush.msra.mxu0 0.0
    %1479 = vmatpush.msra.mxu0 0.0
    %1480 = vmatpush.msra.mxu0 0.0
    %1481 = vmatpush.msra.mxu0 0.0
    %1482 = vmatpush.msra.mxu0 0.0
    %1483 = vmatpush.msra.mxu0 0.0
    %1484 = vmatpush.msra.mxu0 0.0
    %1485 = vmatpush.msra.mxu0 %v1393
    %1486 = vmatpush.msra.mxu0 %v1392
    %1487 = vmatpush.msra.mxu0 %v1391
    %1488 = vmatpush.msra.mxu0 %v1390
    %1489 = vmatmul.f32.gmra.mxu0 %v1411
    %v1490 = vpop.f32.mrf.mxu0
    %v1491 = vadd.f32 0.0, %v1490
    %1492 = vdwg.mxu0
    %v1494 = vsel %vm27, %v1376, 0
    %1496 = vmatpush.msra.mxu0 0.0
    %1497 = vmatpush.msra.mxu0 0.0
    %1498 = vmatpush.msra.mxu0 0.0
    %1499 = vmatpush.msra.mxu0 0.0
    %1500 = vmatpush.msra.mxu0 0.0
    %1501 = vmatpush.msra.mxu0 0.0
    %1502 = vmatpush.msra.mxu0 0.0
    %1503 = vmatpush.msra.mxu0 0.0
    %1504 = vmatpush.msra.mxu0 0.0
    %1505 = vmatpush.msra.mxu0 0.0
    %1506 = vmatpush.msra.mxu0 0.0
    %1507 = vmatpush.msra.mxu0 0.0
    %1508 = vmatpush.msra.mxu0 %v1397
    %1509 = vmatpush.msra.mxu0 %v1396
    %1510 = vmatpush.msra.mxu0 %v1395
    %1511 = vmatpush.msra.mxu0 %v1394
    %1512 = vmatmul.f32.gmra.mxu0 %v1494
    %v1513 = vpop.f32.mrf.mxu0
    %v1514 = vadd.f32 0.0, %v1513
    %1515 = vdwg.mxu0
    %1516 = vmatpush.msra.mxu0 0.0
    %1517 = vmatpush.msra.mxu0 0.0
    %1518 = vmatpush.msra.mxu0 0.0
    %1519 = vmatpush.msra.mxu0 0.0
    %1520 = vmatpush.msra.mxu0 0.0
    %1521 = vmatpush.msra.mxu0 0.0
    %1522 = vmatpush.msra.mxu0 0.0
    %1523 = vmatpush.msra.mxu0 0.0
    %1524 = vmatpush.msra.mxu0 0.0
    %1525 = vmatpush.msra.mxu0 0.0
    %1526 = vmatpush.msra.mxu0 0.0
    %1527 = vmatpush.msra.mxu0 0.0
    %1528 = vmatpush.msra.mxu0 %v1401
    %1529 = vmatpush.msra.mxu0 %v1400
    %1530 = vmatpush.msra.mxu0 %v1399
    %1531 = vmatpush.msra.mxu0 %v1398
    %1532 = vmatmul.f32.gmra.mxu0 %v1494
    %v1533 = vpop.f32.mrf.mxu0
    %v1534 = vadd.f32 0.0, %v1533
    %1535 = vdwg.mxu0
    %1536 = vmatpush.msra.mxu0 0.0
    %1537 = vmatpush.msra.mxu0 0.0
    %1538 = vmatpush.msra.mxu0 0.0
    %1539 = vmatpush.msra.mxu0 0.0
    %1540 = vmatpush.msra.mxu0 0.0
    %1541 = vmatpush.msra.mxu0 0.0
    %1542 = vmatpush.msra.mxu0 0.0
    %1543 = vmatpush.msra.mxu0 0.0
    %1544 = vmatpush.msra.mxu0 0.0
    %1545 = vmatpush.msra.mxu0 0.0
    %1546 = vmatpush.msra.mxu0 0.0
    %1547 = vmatpush.msra.mxu0 0.0
    %1548 = vmatpush.msra.mxu0 %v1405
    %1549 = vmatpush.msra.mxu0 %v1404
    %1550 = vmatpush.msra.mxu0 %v1403
    %1551 = vmatpush.msra.mxu0 %v1402
    %1552 = vmatmul.f32.gmra.mxu0 %v1494
    %v1553 = vpop.f32.mrf.mxu0
    %v1554 = vadd.f32 0.0, %v1553
    %1555 = vdwg.mxu0
    %1556 = vmatpush.msra.mxu0 0.0
    %1557 = vmatpush.msra.mxu0 0.0
    %1558 = vmatpush.msra.mxu0 0.0
    %1559 = vmatpush.msra.mxu0 0.0
    %1560 = vmatpush.msra.mxu0 0.0
    %1561 = vmatpush.msra.mxu0 0.0
    %1562 = vmatpush.msra.mxu0 0.0
    %1563 = vmatpush.msra.mxu0 0.0
    %1564 = vmatpush.msra.mxu0 0.0
    %1565 = vmatpush.msra.mxu0 0.0
    %1566 = vmatpush.msra.mxu0 0.0
    %1567 = vmatpush.msra.mxu0 0.0
    %1568 = vmatpush.msra.mxu0 %v1409
    %1569 = vmatpush.msra.mxu0 %v1408
    %1570 = vmatpush.msra.mxu0 %v1407
    %1571 = vmatpush.msra.mxu0 %v1406
    %1572 = vmatmul.f32.gmra.mxu0 %v1494
    %v1573 = vpop.f32.mrf.mxu0
    %v1574 = vadd.f32 0.0, %v1573
    %1575 = vdwg.mxu0
    %1577 = vrot.lane.b32.xlu0 %v1431, 120
    %v1578 = vpop.permute.xlu0 %1577
    %v1579 = vsel %vm286, %v1431, 0
    %v1581 = vsel %vm286, %v1578, 0
    %1583 = vmatpush.xpose.msra.mxu0 0.0
    %1584 = vmatpush.xpose.msra.mxu0 0.0
    %1585 = vmatpush.xpose.msra.mxu0 0.0
    %1586 = vmatpush.xpose.msra.mxu0 0.0
    %1587 = vmatpush.xpose.msra.mxu0 0.0
    %1588 = vmatpush.xpose.msra.mxu0 0.0
    %1589 = vmatpush.xpose.msra.mxu0 0.0
    %1590 = vmatpush.xpose.msra.mxu0 0.0
    %1591 = vmatpush.xpose.msra.mxu0 0.0
    %1592 = vmatpush.xpose.msra.mxu0 0.0
    %1593 = vmatpush.xpose.msra.mxu0 0.0
    %1594 = vmatpush.xpose.msra.mxu0 0.0
    %1595 = vmatpush.xpose.msra.mxu0 0.0
    %1596 = vmatpush.xpose.msra.mxu0 0.0
    %1597 = vmatpush.xpose.msra.mxu0 0.0
    %1598 = vmatpush.xpose.msra.mxu0 %v1581
    %1599 = vmatmul.f32.gmra.mxu0 %v1579
    %v1600 = vpop.f32.mrf.mxu0
    %v1601 = vadd.f32 0.0, %v1600
    %1602 = vdwg.mxu0
    %1604 = vrot.lane.b32.xlu0 %v1451, 120
    %v1605 = vpop.permute.xlu0 %1604
    %v1606 = vsel %vm286, %v1451, 0
    %v1608 = vsel %vm286, %v1605, 0
    %1610 = vmatpush.xpose.msra.mxu0 0.0
    %1611 = vmatpush.xpose.msra.mxu0 0.0
    %1612 = vmatpush.xpose.msra.mxu0 0.0
    %1613 = vmatpush.xpose.msra.mxu0 0.0
    %1614 = vmatpush.xpose.msra.mxu0 0.0
    %1615 = vmatpush.xpose.msra.mxu0 0.0
    %1616 = vmatpush.xpose.msra.mxu0 0.0
    %1617 = vmatpush.xpose.msra.mxu0 0.0
    %1618 = vmatpush.xpose.msra.mxu0 0.0
    %1619 = vmatpush.xpose.msra.mxu0 0.0
    %1620 = vmatpush.xpose.msra.mxu0 0.0
    %1621 = vmatpush.xpose.msra.mxu0 0.0
    %1622 = vmatpush.xpose.msra.mxu0 0.0
    %1623 = vmatpush.xpose.msra.mxu0 0.0
    %1624 = vmatpush.xpose.msra.mxu0 0.0
    %1625 = vmatpush.xpose.msra.mxu0 %v1608
    %1626 = vmatmul.f32.gmra.mxu0 %v1606
    %v1627 = vpop.f32.mrf.mxu0
    %v1628 = vadd.f32 0.0, %v1627
    %1629 = vdwg.mxu0
    %1631 = vrot.lane.b32.xlu0 %v1471, 120
    %v1632 = vpop.permute.xlu0 %1631
    %v1633 = vsel %vm286, %v1471, 0
    %v1635 = vsel %vm286, %v1632, 0
    %1637 = vmatpush.xpose.msra.mxu0 0.0
    %1638 = vmatpush.xpose.msra.mxu0 0.0
    %1639 = vmatpush.xpose.msra.mxu0 0.0
    %1640 = vmatpush.xpose.msra.mxu0 0.0
    %1641 = vmatpush.xpose.msra.mxu0 0.0
    %1642 = vmatpush.xpose.msra.mxu0 0.0
    %1643 = vmatpush.xpose.msra.mxu0 0.0
    %1644 = vmatpush.xpose.msra.mxu0 0.0
    %1645 = vmatpush.xpose.msra.mxu0 0.0
    %1646 = vmatpush.xpose.msra.mxu0 0.0
    %1647 = vmatpush.xpose.msra.mxu0 0.0
    %1648 = vmatpush.xpose.msra.mxu0 0.0
    %1649 = vmatpush.xpose.msra.mxu0 0.0
    %1650 = vmatpush.xpose.msra.mxu0 0.0
    %1651 = vmatpush.xpose.msra.mxu0 0.0
    %1652 = vmatpush.xpose.msra.mxu0 %v1635
    %1653 = vmatmul.f32.gmra.mxu0 %v1633
    %v1654 = vpop.f32.mrf.mxu0
    %v1655 = vadd.f32 0.0, %v1654
    %1656 = vdwg.mxu0
    %1658 = vrot.lane.b32.xlu0 %v1491, 120
    %v1659 = vpop.permute.xlu0 %1658
    %v1660 = vsel %vm286, %v1491, 0
    %v1662 = vsel %vm286, %v1659, 0
    %1664 = vmatpush.xpose.msra.mxu0 0.0
    %1665 = vmatpush.xpose.msra.mxu0 0.0
    %1666 = vmatpush.xpose.msra.mxu0 0.0
    %1667 = vmatpush.xpose.msra.mxu0 0.0
    %1668 = vmatpush.xpose.msra.mxu0 0.0
    %1669 = vmatpush.xpose.msra.mxu0 0.0
    %1670 = vmatpush.xpose.msra.mxu0 0.0
    %1671 = vmatpush.xpose.msra.mxu0 0.0
    %1672 = vmatpush.xpose.msra.mxu0 0.0
    %1673 = vmatpush.xpose.msra.mxu0 0.0
    %1674 = vmatpush.xpose.msra.mxu0 0.0
    %1675 = vmatpush.xpose.msra.mxu0 0.0
    %1676 = vmatpush.xpose.msra.mxu0 0.0
    %1677 = vmatpush.xpose.msra.mxu0 0.0
    %1678 = vmatpush.xpose.msra.mxu0 0.0
    %1679 = vmatpush.xpose.msra.mxu0 %v1662
    %1680 = vmatmul.f32.gmra.mxu0 %v1660
    %v1681 = vpop.f32.mrf.mxu0
    %v1682 = vadd.f32 0.0, %v1681
    %1683 = vdwg.mxu0
    %1685 = vrot.lane.b32.xlu0 %v1514, 120
    %v1686 = vpop.permute.xlu0 %1685
    %v1687 = vsel %vm286, %v1514, 0
    %v1689 = vsel %vm286, %v1686, 0
    %1691 = vmatpush.xpose.msra.mxu0 0.0
    %1692 = vmatpush.xpose.msra.mxu0 0.0
    %1693 = vmatpush.xpose.msra.mxu0 0.0
    %1694 = vmatpush.xpose.msra.mxu0 0.0
    %1695 = vmatpush.xpose.msra.mxu0 0.0
    %1696 = vmatpush.xpose.msra.mxu0 0.0
    %1697 = vmatpush.xpose.msra.mxu0 0.0
    %1698 = vmatpush.xpose.msra.mxu0 0.0
    %1699 = vmatpush.xpose.msra.mxu0 0.0
    %1700 = vmatpush.xpose.msra.mxu0 0.0
    %1701 = vmatpush.xpose.msra.mxu0 0.0
    %1702 = vmatpush.xpose.msra.mxu0 0.0
    %1703 = vmatpush.xpose.msra.mxu0 0.0
    %1704 = vmatpush.xpose.msra.mxu0 0.0
    %1705 = vmatpush.xpose.msra.mxu0 0.0
    %1706 = vmatpush.xpose.msra.mxu0 %v1689
    %1707 = vmatmul.f32.gmra.mxu0 %v1687
    %v1708 = vpop.f32.mrf.mxu0
    %v1709 = vadd.f32 0.0, %v1708
    %1710 = vdwg.mxu0
    %1712 = vrot.lane.b32.xlu0 %v1534, 120
    %v1713 = vpop.permute.xlu0 %1712
    %v1714 = vsel %vm286, %v1534, 0
    %v1716 = vsel %vm286, %v1713, 0
    %1718 = vmatpush.xpose.msra.mxu0 0.0
    %1719 = vmatpush.xpose.msra.mxu0 0.0
    %1720 = vmatpush.xpose.msra.mxu0 0.0
    %1721 = vmatpush.xpose.msra.mxu0 0.0
    %1722 = vmatpush.xpose.msra.mxu0 0.0
    %1723 = vmatpush.xpose.msra.mxu0 0.0
    %1724 = vmatpush.xpose.msra.mxu0 0.0
    %1725 = vmatpush.xpose.msra.mxu0 0.0
    %1726 = vmatpush.xpose.msra.mxu0 0.0
    %1727 = vmatpush.xpose.msra.mxu0 0.0
    %1728 = vmatpush.xpose.msra.mxu0 0.0
    %1729 = vmatpush.xpose.msra.mxu0 0.0
    %1730 = vmatpush.xpose.msra.mxu0 0.0
    %1731 = vmatpush.xpose.msra.mxu0 0.0
    %1732 = vmatpush.xpose.msra.mxu0 0.0
    %1733 = vmatpush.xpose.msra.mxu0 %v1716
    %1734 = vmatmul.f32.gmra.mxu0 %v1714
    %v1735 = vpop.f32.mrf.mxu0
    %v1736 = vadd.f32 0.0, %v1735
    %1737 = vdwg.mxu0
    %1739 = vrot.lane.b32.xlu0 %v1554, 120
    %v1740 = vpop.permute.xlu0 %1739
    %v1741 = vsel %vm286, %v1554, 0
    %v1743 = vsel %vm286, %v1740, 0
    %1745 = vmatpush.xpose.msra.mxu0 0.0
    %1746 = vmatpush.xpose.msra.mxu0 0.0
    %1747 = vmatpush.xpose.msra.mxu0 0.0
    %1748 = vmatpush.xpose.msra.mxu0 0.0
    %1749 = vmatpush.xpose.msra.mxu0 0.0
    %1750 = vmatpush.xpose.msra.mxu0 0.0
    %1751 = vmatpush.xpose.msra.mxu0 0.0
    %1752 = vmatpush.xpose.msra.mxu0 0.0
    %1753 = vmatpush.xpose.msra.mxu0 0.0
    %1754 = vmatpush.xpose.msra.mxu0 0.0
    %1755 = vmatpush.xpose.msra.mxu0 0.0
    %1756 = vmatpush.xpose.msra.mxu0 0.0
    %1757 = vmatpush.xpose.msra.mxu0 0.0
    %1758 = vmatpush.xpose.msra.mxu0 0.0
    %1759 = vmatpush.xpose.msra.mxu0 0.0
    %1760 = vmatpush.xpose.msra.mxu0 %v1743
    %1761 = vmatmul.f32.gmra.mxu0 %v1741
    %v1762 = vpop.f32.mrf.mxu0
    %v1763 = vadd.f32 0.0, %v1762
    %1764 = vdwg.mxu0
    %1766 = vrot.lane.b32.xlu0 %v1574, 120
    %v1767 = vpop.permute.xlu0 %1766
    %v1768 = vsel %vm286, %v1574, 0
    %v1770 = vsel %vm286, %v1767, 0
    %1772 = vmatpush.xpose.msra.mxu0 0.0
    %1773 = vmatpush.xpose.msra.mxu0 0.0
    %1774 = vmatpush.xpose.msra.mxu0 0.0
    %1775 = vmatpush.xpose.msra.mxu0 0.0
    %1776 = vmatpush.xpose.msra.mxu0 0.0
    %1777 = vmatpush.xpose.msra.mxu0 0.0
    %1778 = vmatpush.xpose.msra.mxu0 0.0
    %1779 = vmatpush.xpose.msra.mxu0 0.0
    %1780 = vmatpush.xpose.msra.mxu0 0.0
    %1781 = vmatpush.xpose.msra.mxu0 0.0
    %1782 = vmatpush.xpose.msra.mxu0 0.0
    %1783 = vmatpush.xpose.msra.mxu0 0.0
    %1784 = vmatpush.xpose.msra.mxu0 0.0
    %1785 = vmatpush.xpose.msra.mxu0 0.0
    %1786 = vmatpush.xpose.msra.mxu0 0.0
    %1787 = vmatpush.xpose.msra.mxu0 %v1770
    %1788 = vmatmul.f32.gmra.mxu0 %v1768
    %v1789 = vpop.f32.mrf.mxu0
    %v1790 = vadd.f32 0.0, %v1789
    %1791 = vdwg.mxu0
    %v1792 = vsel %vm286, %v1601, -inf
    %1793 = vmax.xlane.f32.xlu0 %v1792
    %v1794 = vpop.xlane.xlu0 %1793
    %v1795 = vsel %vm286, %v1628, -inf
    %1796 = vmax.xlane.f32.xlu0 %v1795
    %v1797 = vpop.xlane.xlu0 %1796
    %v1798 = vsel %vm286, %v1655, -inf
    %1799 = vmax.xlane.f32.xlu0 %v1798
    %v1800 = vpop.xlane.xlu0 %1799
    %v1801 = vsel %vm286, %v1682, -inf
    %1802 = vmax.xlane.f32.xlu0 %v1801
    %v1803 = vpop.xlane.xlu0 %1802
    %v1804 = vsel %vm286, %v1709, -inf
    %1805 = vmax.xlane.f32.xlu0 %v1804
    %v1806 = vpop.xlane.xlu0 %1805
    %v1807 = vsel %vm286, %v1736, -inf
    %1808 = vmax.xlane.f32.xlu0 %v1807
    %v1809 = vpop.xlane.xlu0 %1808
    %v1810 = vsel %vm286, %v1763, -inf
    %1811 = vmax.xlane.f32.xlu0 %v1810
    %v1812 = vpop.xlane.xlu0 %1811
    %v1813 = vsel %vm286, %v1790, -inf
    %1814 = vmax.xlane.f32.xlu0 %v1813
    %v1815 = vpop.xlane.xlu0 %1814
    %v1816 = vsub.f32 %v1601, %v1794
    %v1817 = vsub.f32 %v1628, %v1797
    %v1818 = vsub.f32 %v1655, %v1800
    %v1819 = vsub.f32 %v1682, %v1803
    %v1820 = vsub.f32 %v1709, %v1806
    %v1821 = vsub.f32 %v1736, %v1809
    %v1822 = vsub.f32 %v1763, %v1812
    %v1823 = vsub.f32 %v1790, %v1815
    %v1824 = vmul.f32 %v1816, 1.442695
    %v1825 = vpow.pop %v1824
    %v1826 = vmul.f32 %v1817, 1.442695
    %v1827 = vpow.pop %v1826
    %v1828 = vmul.f32 %v1818, 1.442695
    %v1829 = vpow.pop %v1828
    %v1830 = vmul.f32 %v1819, 1.442695
    %v1831 = vpow.pop %v1830
    %v1832 = vmul.f32 %v1820, 1.442695
    %v1833 = vpow.pop %v1832
    %v1834 = vmul.f32 %v1821, 1.442695
    %v1835 = vpow.pop %v1834
    %v1836 = vmul.f32 %v1822, 1.442695
    %v1837 = vpow.pop %v1836
    %v1838 = vmul.f32 %v1823, 1.442695
    %v1839 = vpow.pop %v1838
    %v1840 = vsel %vm286, %v1825, 0.0
    %1841 = vadd.xlane.f32.xlu0 %v1840
    %v1842 = vpop.xlane.xlu0 %1841
    %v1843 = vsel %vm286, %v1827, 0.0
    %1844 = vadd.xlane.f32.xlu0 %v1843
    %v1845 = vpop.xlane.xlu0 %1844
    %v1846 = vsel %vm286, %v1829, 0.0
    %1847 = vadd.xlane.f32.xlu0 %v1846
    %v1848 = vpop.xlane.xlu0 %1847
    %v1849 = vsel %vm286, %v1831, 0.0
    %1850 = vadd.xlane.f32.xlu0 %v1849
    %v1851 = vpop.xlane.xlu0 %1850
    %v1852 = vsel %vm286, %v1833, 0.0
    %1853 = vadd.xlane.f32.xlu0 %v1852
    %v1854 = vpop.xlane.xlu0 %1853
    %v1855 = vsel %vm286, %v1835, 0.0
    %1856 = vadd.xlane.f32.xlu0 %v1855
    %v1857 = vpop.xlane.xlu0 %1856
    %v1858 = vsel %vm286, %v1837, 0.0
    %1859 = vadd.xlane.f32.xlu0 %v1858
    %v1860 = vpop.xlane.xlu0 %1859
    %v1861 = vsel %vm286, %v1839, 0.0
    %1862 = vadd.xlane.f32.xlu0 %v1861
    %v1863 = vpop.xlane.xlu0 %1862
    %v1864 = vrcp.pop %v1842
    %v1865 = vmul.f32 %v1842, %v1864
    %v1866 = vsub.f32 1.0, %v1865
    %v1867 = vmul.f32 %v1864, %v1866
    %v1868 = vadd.f32 %v1864, %v1867
    %vm1869 = vweird.f32 %v1842
    %vm1870 = vweird.f32 %v1864
    %vm1871 = vmor %vm1869, %vm1870
    %v1872 = vsel %vm1871, %v1864, %v1868
    %v1873 = vand.u32 2147483647, %v1842
    %vm1874 = vcmp.eq.f32.partialorder %v1873, 8.507059e+37
    %v1875 = vand.u32 %v1842, 2147483648
    %v1876 = vor.u32 1.1754944e-38, %v1875
    %v1877 = vsel %vm1874, %v1876, %v1872
    %v1878 = vmul.f32 %v1825, %v1877
    %v1879 = vrcp.pop %v1845
    %v1880 = vmul.f32 %v1845, %v1879
    %v1881 = vsub.f32 1.0, %v1880
    %v1882 = vmul.f32 %v1879, %v1881
    %v1883 = vadd.f32 %v1879, %v1882
    %vm1884 = vweird.f32 %v1845
    %vm1885 = vweird.f32 %v1879
    %vm1886 = vmor %vm1884, %vm1885
    %v1887 = vsel %vm1886, %v1879, %v1883
    %v1888 = vand.u32 2147483647, %v1845
    %vm1889 = vcmp.eq.f32.partialorder %v1888, 8.507059e+37
    %v1890 = vand.u32 %v1845, 2147483648
    %v1891 = vor.u32 1.1754944e-38, %v1890
    %v1892 = vsel %vm1889, %v1891, %v1887
    %v1893 = vmul.f32 %v1827, %v1892
    %v1894 = vrcp.pop %v1848
    %v1895 = vmul.f32 %v1848, %v1894
    %v1896 = vsub.f32 1.0, %v1895
    %v1897 = vmul.f32 %v1894, %v1896
    %v1898 = vadd.f32 %v1894, %v1897
    %vm1899 = vweird.f32 %v1848
    %vm1900 = vweird.f32 %v1894
    %vm1901 = vmor %vm1899, %vm1900
    %v1902 = vsel %vm1901, %v1894, %v1898
    %v1903 = vand.u32 2147483647, %v1848
    %vm1904 = vcmp.eq.f32.partialorder %v1903, 8.507059e+37
    %v1905 = vand.u32 %v1848, 2147483648
    %v1906 = vor.u32 1.1754944e-38, %v1905
    %v1907 = vsel %vm1904, %v1906, %v1902
    %v1908 = vmul.f32 %v1829, %v1907
    %v1909 = vrcp.pop %v1851
    %v1910 = vmul.f32 %v1851, %v1909
    %v1911 = vsub.f32 1.0, %v1910
    %v1912 = vmul.f32 %v1909, %v1911
    %v1913 = vadd.f32 %v1909, %v1912
    %vm1914 = vweird.f32 %v1851
    %vm1915 = vweird.f32 %v1909
    %vm1916 = vmor %vm1914, %vm1915
    %v1917 = vsel %vm1916, %v1909, %v1913
    %v1918 = vand.u32 2147483647, %v1851
    %vm1919 = vcmp.eq.f32.partialorder %v1918, 8.507059e+37
    %v1920 = vand.u32 %v1851, 2147483648
    %v1921 = vor.u32 1.1754944e-38, %v1920
    %v1922 = vsel %vm1919, %v1921, %v1917
    %v1923 = vmul.f32 %v1831, %v1922
    %v1924 = vrcp.pop %v1854
    %v1925 = vmul.f32 %v1854, %v1924
    %v1926 = vsub.f32 1.0, %v1925
    %v1927 = vmul.f32 %v1924, %v1926
    %v1928 = vadd.f32 %v1924, %v1927
    %vm1929 = vweird.f32 %v1854
    %vm1930 = vweird.f32 %v1924
    %vm1931 = vmor %vm1929, %vm1930
    %v1932 = vsel %vm1931, %v1924, %v1928
    %v1933 = vand.u32 2147483647, %v1854
    %vm1934 = vcmp.eq.f32.partialorder %v1933, 8.507059e+37
    %v1935 = vand.u32 %v1854, 2147483648
    %v1936 = vor.u32 1.1754944e-38, %v1935
    %v1937 = vsel %vm1934, %v1936, %v1932
    %v1938 = vmul.f32 %v1833, %v1937
    %v1939 = vrcp.pop %v1857
    %v1940 = vmul.f32 %v1857, %v1939
    %v1941 = vsub.f32 1.0, %v1940
    %v1942 = vmul.f32 %v1939, %v1941
    %v1943 = vadd.f32 %v1939, %v1942
    %vm1944 = vweird.f32 %v1857
    %vm1945 = vweird.f32 %v1939
    %vm1946 = vmor %vm1944, %vm1945
    %v1947 = vsel %vm1946, %v1939, %v1943
    %v1948 = vand.u32 2147483647, %v1857
    %vm1949 = vcmp.eq.f32.partialorder %v1948, 8.507059e+37
    %v1950 = vand.u32 %v1857, 2147483648
    %v1951 = vor.u32 1.1754944e-38, %v1950
    %v1952 = vsel %vm1949, %v1951, %v1947
    %v1953 = vmul.f32 %v1835, %v1952
    %v1954 = vrcp.pop %v1860
    %v1955 = vmul.f32 %v1860, %v1954
    %v1956 = vsub.f32 1.0, %v1955
    %v1957 = vmul.f32 %v1954, %v1956
    %v1958 = vadd.f32 %v1954, %v1957
    %vm1959 = vweird.f32 %v1860
    %vm1960 = vweird.f32 %v1954
    %vm1961 = vmor %vm1959, %vm1960
    %v1962 = vsel %vm1961, %v1954, %v1958
    %v1963 = vand.u32 2147483647, %v1860
    %vm1964 = vcmp.eq.f32.partialorder %v1963, 8.507059e+37
    %v1965 = vand.u32 %v1860, 2147483648
    %v1966 = vor.u32 1.1754944e-38, %v1965
    %v1967 = vsel %vm1964, %v1966, %v1962
    %v1968 = vmul.f32 %v1837, %v1967
    %v1969 = vrcp.pop %v1863
    %v1970 = vmul.f32 %v1863, %v1969
    %v1971 = vsub.f32 1.0, %v1970
    %v1972 = vmul.f32 %v1969, %v1971
    %v1973 = vadd.f32 %v1969, %v1972
    %vm1974 = vweird.f32 %v1863
    %vm1975 = vweird.f32 %v1969
    %vm1976 = vmor %vm1974, %vm1975
    %v1977 = vsel %vm1976, %v1969, %v1973
    %v1978 = vand.u32 2147483647, %v1863
    %vm1979 = vcmp.eq.f32.partialorder %v1978, 8.507059e+37
    %v1980 = vand.u32 %v1863, 2147483648
    %v1981 = vor.u32 1.1754944e-38, %v1980
    %v1982 = vsel %vm1979, %v1981, %v1977
    %v1983 = vmul.f32 %v1839, %v1982
    %1984 = vrot.lane.b32.xlu0 %v1431, 112
    %v1985 = vpop.permute.xlu0 %1984
    %v1988 = vsel %vm286, %v1878, 0
    %1990 = vmatpush.msra.mxu0 0.0
    %1991 = vmatpush.msra.mxu0 0.0
    %1992 = vmatpush.msra.mxu0 0.0
    %1993 = vmatpush.msra.mxu0 0.0
    %1994 = vmatpush.msra.mxu0 0.0
    %1995 = vmatpush.msra.mxu0 0.0
    %1996 = vmatpush.msra.mxu0 0.0
    %1997 = vmatpush.msra.mxu0 0.0
    %1998 = vmatpush.msra.mxu0 0.0
    %1999 = vmatpush.msra.mxu0 0.0
    %2000 = vmatpush.msra.mxu0 0.0
    %2001 = vmatpush.msra.mxu0 0.0
    %2002 = vmatpush.msra.mxu0 0.0
    %2003 = vmatpush.msra.mxu0 0.0
    %2004 = vmatpush.msra.mxu0 0.0
    %2005 = vmatpush.msra.mxu0 %v1985
    %2006 = vmatmul.f32.gmra.mxu0 %v1988
    %v2007 = vpop.f32.mrf.mxu0
    %v2008 = vadd.f32 0.0, %v2007
    %2009 = vdwg.mxu0
    %2010 = vrot.lane.b32.xlu0 %v1451, 112
    %v2011 = vpop.permute.xlu0 %2010
    %v2014 = vsel %vm286, %v1893, 0
    %2016 = vmatpush.msra.mxu0 0.0
    %2017 = vmatpush.msra.mxu0 0.0
    %2018 = vmatpush.msra.mxu0 0.0
    %2019 = vmatpush.msra.mxu0 0.0
    %2020 = vmatpush.msra.mxu0 0.0
    %2021 = vmatpush.msra.mxu0 0.0
    %2022 = vmatpush.msra.mxu0 0.0
    %2023 = vmatpush.msra.mxu0 0.0
    %2024 = vmatpush.msra.mxu0 0.0
    %2025 = vmatpush.msra.mxu0 0.0
    %2026 = vmatpush.msra.mxu0 0.0
    %2027 = vmatpush.msra.mxu0 0.0
    %2028 = vmatpush.msra.mxu0 0.0
    %2029 = vmatpush.msra.mxu0 0.0
    %2030 = vmatpush.msra.mxu0 0.0
    %2031 = vmatpush.msra.mxu0 %v2011
    %2032 = vmatmul.f32.gmra.mxu0 %v2014
    %v2033 = vpop.f32.mrf.mxu0
    %v2034 = vadd.f32 0.0, %v2033
    %2035 = vdwg.mxu0
    %2036 = vrot.lane.b32.xlu0 %v1471, 112
    %v2037 = vpop.permute.xlu0 %2036
    %v2040 = vsel %vm286, %v1908, 0
    %2042 = vmatpush.msra.mxu0 0.0
    %2043 = vmatpush.msra.mxu0 0.0
    %2044 = vmatpush.msra.mxu0 0.0
    %2045 = vmatpush.msra.mxu0 0.0
    %2046 = vmatpush.msra.mxu0 0.0
    %2047 = vmatpush.msra.mxu0 0.0
    %2048 = vmatpush.msra.mxu0 0.0
    %2049 = vmatpush.msra.mxu0 0.0
    %2050 = vmatpush.msra.mxu0 0.0
    %2051 = vmatpush.msra.mxu0 0.0
    %2052 = vmatpush.msra.mxu0 0.0
    %2053 = vmatpush.msra.mxu0 0.0
    %2054 = vmatpush.msra.mxu0 0.0
    %2055 = vmatpush.msra.mxu0 0.0
    %2056 = vmatpush.msra.mxu0 0.0
    %2057 = vmatpush.msra.mxu0 %v2037
    %2058 = vmatmul.f32.gmra.mxu0 %v2040
    %v2059 = vpop.f32.mrf.mxu0
    %v2060 = vadd.f32 0.0, %v2059
    %2061 = vdwg.mxu0
    %2062 = vrot.lane.b32.xlu0 %v1491, 112
    %v2063 = vpop.permute.xlu0 %2062
    %v2066 = vsel %vm286, %v1923, 0
    %2068 = vmatpush.msra.mxu0 0.0
    %2069 = vmatpush.msra.mxu0 0.0
    %2070 = vmatpush.msra.mxu0 0.0
    %2071 = vmatpush.msra.mxu0 0.0
    %2072 = vmatpush.msra.mxu0 0.0
    %2073 = vmatpush.msra.mxu0 0.0
    %2074 = vmatpush.msra.mxu0 0.0
    %2075 = vmatpush.msra.mxu0 0.0
    %2076 = vmatpush.msra.mxu0 0.0
    %2077 = vmatpush.msra.mxu0 0.0
    %2078 = vmatpush.msra.mxu0 0.0
    %2079 = vmatpush.msra.mxu0 0.0
    %2080 = vmatpush.msra.mxu0 0.0
    %2081 = vmatpush.msra.mxu0 0.0
    %2082 = vmatpush.msra.mxu0 0.0
    %2083 = vmatpush.msra.mxu0 %v2063
    %2084 = vmatmul.f32.gmra.mxu0 %v2066
    %v2085 = vpop.f32.mrf.mxu0
    %v2086 = vadd.f32 0.0, %v2085
    %2087 = vdwg.mxu0
    %2088 = vrot.lane.b32.xlu0 %v1514, 112
    %v2089 = vpop.permute.xlu0 %2088
    %v2092 = vsel %vm286, %v1938, 0
    %2094 = vmatpush.msra.mxu0 0.0
    %2095 = vmatpush.msra.mxu0 0.0
    %2096 = vmatpush.msra.mxu0 0.0
    %2097 = vmatpush.msra.mxu0 0.0
    %2098 = vmatpush.msra.mxu0 0.0
    %2099 = vmatpush.msra.mxu0 0.0
    %2100 = vmatpush.msra.mxu0 0.0
    %2101 = vmatpush.msra.mxu0 0.0
    %2102 = vmatpush.msra.mxu0 0.0
    %2103 = vmatpush.msra.mxu0 0.0
    %2104 = vmatpush.msra.mxu0 0.0
    %2105 = vmatpush.msra.mxu0 0.0
    %2106 = vmatpush.msra.mxu0 0.0
    %2107 = vmatpush.msra.mxu0 0.0
    %2108 = vmatpush.msra.mxu0 0.0
    %2109 = vmatpush.msra.mxu0 %v2089
    %2110 = vmatmul.f32.gmra.mxu0 %v2092
    %v2111 = vpop.f32.mrf.mxu0
    %v2112 = vadd.f32 0.0, %v2111
    %2113 = vdwg.mxu0
    %2114 = vrot.lane.b32.xlu0 %v1534, 112
    %v2115 = vpop.permute.xlu0 %2114
    %v2118 = vsel %vm286, %v1953, 0
    %2120 = vmatpush.msra.mxu0 0.0
    %2121 = vmatpush.msra.mxu0 0.0
    %2122 = vmatpush.msra.mxu0 0.0
    %2123 = vmatpush.msra.mxu0 0.0
    %2124 = vmatpush.msra.mxu0 0.0
    %2125 = vmatpush.msra.mxu0 0.0
    %2126 = vmatpush.msra.mxu0 0.0
    %2127 = vmatpush.msra.mxu0 0.0
    %2128 = vmatpush.msra.mxu0 0.0
    %2129 = vmatpush.msra.mxu0 0.0
    %2130 = vmatpush.msra.mxu0 0.0
    %2131 = vmatpush.msra.mxu0 0.0
    %2132 = vmatpush.msra.mxu0 0.0
    %2133 = vmatpush.msra.mxu0 0.0
    %2134 = vmatpush.msra.mxu0 0.0
    %2135 = vmatpush.msra.mxu0 %v2115
    %2136 = vmatmul.f32.gmra.mxu0 %v2118
    %v2137 = vpop.f32.mrf.mxu0
    %v2138 = vadd.f32 0.0, %v2137
    %2139 = vdwg.mxu0
    %2140 = vrot.lane.b32.xlu0 %v1554, 112
    %v2141 = vpop.permute.xlu0 %2140
    %v2144 = vsel %vm286, %v1968, 0
    %2146 = vmatpush.msra.mxu0 0.0
    %2147 = vmatpush.msra.mxu0 0.0
    %2148 = vmatpush.msra.mxu0 0.0
    %2149 = vmatpush.msra.mxu0 0.0
    %2150 = vmatpush.msra.mxu0 0.0
    %2151 = vmatpush.msra.mxu0 0.0
    %2152 = vmatpush.msra.mxu0 0.0
    %2153 = vmatpush.msra.mxu0 0.0
    %2154 = vmatpush.msra.mxu0 0.0
    %2155 = vmatpush.msra.mxu0 0.0
    %2156 = vmatpush.msra.mxu0 0.0
    %2157 = vmatpush.msra.mxu0 0.0
    %2158 = vmatpush.msra.mxu0 0.0
    %2159 = vmatpush.msra.mxu0 0.0
    %2160 = vmatpush.msra.mxu0 0.0
    %2161 = vmatpush.msra.mxu0 %v2141
    %2162 = vmatmul.f32.gmra.mxu0 %v2144
    %v2163 = vpop.f32.mrf.mxu0
    %v2164 = vadd.f32 0.0, %v2163
    %2165 = vdwg.mxu0
    %2166 = vrot.lane.b32.xlu0 %v1574, 112
    %v2167 = vpop.permute.xlu0 %2166
    %v2170 = vsel %vm286, %v1983, 0
    %2172 = vmatpush.msra.mxu0 0.0
    %2173 = vmatpush.msra.mxu0 0.0
    %2174 = vmatpush.msra.mxu0 0.0
    %2175 = vmatpush.msra.mxu0 0.0
    %2176 = vmatpush.msra.mxu0 0.0
    %2177 = vmatpush.msra.mxu0 0.0
    %2178 = vmatpush.msra.mxu0 0.0
    %2179 = vmatpush.msra.mxu0 0.0
    %2180 = vmatpush.msra.mxu0 0.0
    %2181 = vmatpush.msra.mxu0 0.0
    %2182 = vmatpush.msra.mxu0 0.0
    %2183 = vmatpush.msra.mxu0 0.0
    %2184 = vmatpush.msra.mxu0 0.0
    %2185 = vmatpush.msra.mxu0 0.0
    %2186 = vmatpush.msra.mxu0 0.0
    %2187 = vmatpush.msra.mxu0 %v2167
    %2188 = vmatmul.f32.gmra.mxu0 %v2170
    %v2189 = vpop.f32.mrf.mxu0
    %v2190 = vadd.f32 0.0, %v2189
    %2191 = vdwg.mxu0
    %s2192 = scalar_lea.vmem %s3, 64
    %v2193 = vld [vmem:[%s2192] sm:$0xff]
    %v2194 = vld [vmem:[%s2192 + $0x8] sm:$0xff]
    %v2195 = vld [vmem:[%s2192 + $0x10] sm:$0xff]
    %v2196 = vld [vmem:[%s2192 + $0x18] sm:$0xff]
    %v2197 = vld [vmem:[%s2192 + $0x20] sm:$0xff]
    %v2198 = vld [vmem:[%s2192 + $0x28] sm:$0xff]
    %v2199 = vld [vmem:[%s2192 + $0x30] sm:$0xff]
    %v2200 = vld [vmem:[%s2192 + $0x38] sm:$0xff]
    %v2202 = vsel %vm286, %v2008, 0
    %2204 = vmatpush.msra.mxu0 0.0
    %2205 = vmatpush.msra.mxu0 0.0
    %2206 = vmatpush.msra.mxu0 0.0
    %2207 = vmatpush.msra.mxu0 0.0
    %2208 = vmatpush.msra.mxu0 0.0
    %2209 = vmatpush.msra.mxu0 0.0
    %2210 = vmatpush.msra.mxu0 0.0
    %2211 = vmatpush.msra.mxu0 0.0
    %2212 = vmatpush.msra.mxu0 0.0
    %2213 = vmatpush.msra.mxu0 0.0
    %2214 = vmatpush.msra.mxu0 0.0
    %2215 = vmatpush.msra.mxu0 0.0
    %2216 = vmatpush.msra.mxu0 0.0
    %2217 = vmatpush.msra.mxu0 0.0
    %2218 = vmatpush.msra.mxu0 0.0
    %2219 = vmatpush.msra.mxu0 %v2193
    %2220 = vmatmul.f32.gmra.mxu0 %v2202
    %v2221 = vpop.f32.mrf.mxu0
    %v2222 = vadd.f32 0.0, %v2221
    %2223 = vdwg.mxu0
    %v2225 = vsel %vm286, %v2034, 0
    %2227 = vmatpush.msra.mxu0 0.0
    %2228 = vmatpush.msra.mxu0 0.0
    %2229 = vmatpush.msra.mxu0 0.0
    %2230 = vmatpush.msra.mxu0 0.0
    %2231 = vmatpush.msra.mxu0 0.0
    %2232 = vmatpush.msra.mxu0 0.0
    %2233 = vmatpush.msra.mxu0 0.0
    %2234 = vmatpush.msra.mxu0 0.0
    %2235 = vmatpush.msra.mxu0 0.0
    %2236 = vmatpush.msra.mxu0 0.0
    %2237 = vmatpush.msra.mxu0 0.0
    %2238 = vmatpush.msra.mxu0 0.0
    %2239 = vmatpush.msra.mxu0 0.0
    %2240 = vmatpush.msra.mxu0 0.0
    %2241 = vmatpush.msra.mxu0 0.0
    %2242 = vmatpush.msra.mxu0 %v2194
    %2243 = vmatmul.f32.gmra.mxu0 %v2225
    %v2244 = vpop.f32.mrf.mxu0
    %v2245 = vadd.f32 0.0, %v2244
    %2246 = vdwg.mxu0
    %v2248 = vsel %vm286, %v2060, 0
    %2250 = vmatpush.msra.mxu0 0.0
    %2251 = vmatpush.msra.mxu0 0.0
    %2252 = vmatpush.msra.mxu0 0.0
    %2253 = vmatpush.msra.mxu0 0.0
    %2254 = vmatpush.msra.mxu0 0.0
    %2255 = vmatpush.msra.mxu0 0.0
    %2256 = vmatpush.msra.mxu0 0.0
    %2257 = vmatpush.msra.mxu0 0.0
    %2258 = vmatpush.msra.mxu0 0.0
    %2259 = vmatpush.msra.mxu0 0.0
    %2260 = vmatpush.msra.mxu0 0.0
    %2261 = vmatpush.msra.mxu0 0.0
    %2262 = vmatpush.msra.mxu0 0.0
    %2263 = vmatpush.msra.mxu0 0.0
    %2264 = vmatpush.msra.mxu0 0.0
    %2265 = vmatpush.msra.mxu0 %v2195
    %2266 = vmatmul.f32.gmra.mxu0 %v2248
    %v2267 = vpop.f32.mrf.mxu0
    %v2268 = vadd.f32 0.0, %v2267
    %2269 = vdwg.mxu0
    %v2271 = vsel %vm286, %v2086, 0
    %2273 = vmatpush.msra.mxu0 0.0
    %2274 = vmatpush.msra.mxu0 0.0
    %2275 = vmatpush.msra.mxu0 0.0
    %2276 = vmatpush.msra.mxu0 0.0
    %2277 = vmatpush.msra.mxu0 0.0
    %2278 = vmatpush.msra.mxu0 0.0
    %2279 = vmatpush.msra.mxu0 0.0
    %2280 = vmatpush.msra.mxu0 0.0
    %2281 = vmatpush.msra.mxu0 0.0
    %2282 = vmatpush.msra.mxu0 0.0
    %2283 = vmatpush.msra.mxu0 0.0
    %2284 = vmatpush.msra.mxu0 0.0
    %2285 = vmatpush.msra.mxu0 0.0
    %2286 = vmatpush.msra.mxu0 0.0
    %2287 = vmatpush.msra.mxu0 0.0
    %2288 = vmatpush.msra.mxu0 %v2196
    %2289 = vmatmul.f32.gmra.mxu0 %v2271
    %v2290 = vpop.f32.mrf.mxu0
    %v2291 = vadd.f32 0.0, %v2290
    %2292 = vdwg.mxu0
    %v2294 = vsel %vm286, %v2112, 0
    %2296 = vmatpush.msra.mxu0 0.0
    %2297 = vmatpush.msra.mxu0 0.0
    %2298 = vmatpush.msra.mxu0 0.0
    %2299 = vmatpush.msra.mxu0 0.0
    %2300 = vmatpush.msra.mxu0 0.0
    %2301 = vmatpush.msra.mxu0 0.0
    %2302 = vmatpush.msra.mxu0 0.0
    %2303 = vmatpush.msra.mxu0 0.0
    %2304 = vmatpush.msra.mxu0 0.0
    %2305 = vmatpush.msra.mxu0 0.0
    %2306 = vmatpush.msra.mxu0 0.0
    %2307 = vmatpush.msra.mxu0 0.0
    %2308 = vmatpush.msra.mxu0 0.0
    %2309 = vmatpush.msra.mxu0 0.0
    %2310 = vmatpush.msra.mxu0 0.0
    %2311 = vmatpush.msra.mxu0 %v2197
    %2312 = vmatmul.f32.gmra.mxu0 %v2294
    %v2313 = vpop.f32.mrf.mxu0
    %v2314 = vadd.f32 0.0, %v2313
    %2315 = vdwg.mxu0
    %v2317 = vsel %vm286, %v2138, 0
    %2319 = vmatpush.msra.mxu0 0.0
    %2320 = vmatpush.msra.mxu0 0.0
    %2321 = vmatpush.msra.mxu0 0.0
    %2322 = vmatpush.msra.mxu0 0.0
    %2323 = vmatpush.msra.mxu0 0.0
    %2324 = vmatpush.msra.mxu0 0.0
    %2325 = vmatpush.msra.mxu0 0.0
    %2326 = vmatpush.msra.mxu0 0.0
    %2327 = vmatpush.msra.mxu0 0.0
    %2328 = vmatpush.msra.mxu0 0.0
    %2329 = vmatpush.msra.mxu0 0.0
    %2330 = vmatpush.msra.mxu0 0.0
    %2331 = vmatpush.msra.mxu0 0.0
    %2332 = vmatpush.msra.mxu0 0.0
    %2333 = vmatpush.msra.mxu0 0.0
    %2334 = vmatpush.msra.mxu0 %v2198
    %2335 = vmatmul.f32.gmra.mxu0 %v2317
    %v2336 = vpop.f32.mrf.mxu0
    %v2337 = vadd.f32 0.0, %v2336
    %2338 = vdwg.mxu0
    %v2340 = vsel %vm286, %v2164, 0
    %2342 = vmatpush.msra.mxu0 0.0
    %2343 = vmatpush.msra.mxu0 0.0
    %2344 = vmatpush.msra.mxu0 0.0
    %2345 = vmatpush.msra.mxu0 0.0
    %2346 = vmatpush.msra.mxu0 0.0
    %2347 = vmatpush.msra.mxu0 0.0
    %2348 = vmatpush.msra.mxu0 0.0
    %2349 = vmatpush.msra.mxu0 0.0
    %2350 = vmatpush.msra.mxu0 0.0
    %2351 = vmatpush.msra.mxu0 0.0
    %2352 = vmatpush.msra.mxu0 0.0
    %2353 = vmatpush.msra.mxu0 0.0
    %2354 = vmatpush.msra.mxu0 0.0
    %2355 = vmatpush.msra.mxu0 0.0
    %2356 = vmatpush.msra.mxu0 0.0
    %2357 = vmatpush.msra.mxu0 %v2199
    %2358 = vmatmul.f32.gmra.mxu0 %v2340
    %v2359 = vpop.f32.mrf.mxu0
    %v2360 = vadd.f32 0.0, %v2359
    %2361 = vdwg.mxu0
    %v2363 = vsel %vm286, %v2190, 0
    %2365 = vmatpush.msra.mxu0 0.0
    %2366 = vmatpush.msra.mxu0 0.0
    %2367 = vmatpush.msra.mxu0 0.0
    %2368 = vmatpush.msra.mxu0 0.0
    %2369 = vmatpush.msra.mxu0 0.0
    %2370 = vmatpush.msra.mxu0 0.0
    %2371 = vmatpush.msra.mxu0 0.0
    %2372 = vmatpush.msra.mxu0 0.0
    %2373 = vmatpush.msra.mxu0 0.0
    %2374 = vmatpush.msra.mxu0 0.0
    %2375 = vmatpush.msra.mxu0 0.0
    %2376 = vmatpush.msra.mxu0 0.0
    %2377 = vmatpush.msra.mxu0 0.0
    %2378 = vmatpush.msra.mxu0 0.0
    %2379 = vmatpush.msra.mxu0 0.0
    %2380 = vmatpush.msra.mxu0 %v2200
    %2381 = vmatmul.f32.gmra.mxu0 %v2363
    %v2382 = vpop.f32.mrf.mxu0
    %v2383 = vadd.f32 0.0, %v2382
    %2384 = vdwg.mxu0
    %v2385 = vsel %vm27, %v2222, 0.0
    %v2386 = vsel %vm27, %v2245, 0.0
    %v2387 = vadd.f32 %v2385, %v2386
    %v2388 = vsel %vm27, %v2268, 0.0
    %v2389 = vadd.f32 %v2387, %v2388
    %v2390 = vsel %vm27, %v2291, 0.0
    %v2391 = vadd.f32 %v2389, %v2390
    %v2392 = vsel %vm27, %v2314, 0.0
    %v2393 = vsel %vm27, %v2337, 0.0
    %v2394 = vadd.f32 %v2392, %v2393
    %v2395 = vsel %vm27, %v2360, 0.0
    %v2396 = vadd.f32 %v2394, %v2395
    %v2397 = vsel %vm27, %v2383, 0.0
    %v2398 = vadd.f32 %v2396, %v2397
    %v2399 = vadd.f32 %v1323, %v2391
    %v2400 = vadd.f32 %v1324, %v2398
    %v2401 = vperm.slane %v1326, 2
    %v2402 = vadd.f32 %v2399, %v2401
    %v2403 = vadd.f32 %v2400, %v2401
    %v2404 = vsel %vm27, %v2402, 0.0
    %2405 = vadd.xlane.f32.xlu0 %v2404
    %v2406 = vpop.xlane.xlu0 %2405
    %v2407 = vsel %vm27, %v2403, 0.0
    %2408 = vadd.xlane.f32.xlu0 %v2407
    %v2409 = vpop.xlane.xlu0 %2408
    %v2410 = vmul.f32 %v2406, %v40
    %v2411 = vmul.f32 %v2409, %v40
    %v2412 = vsub.f32 %v2402, %v2410
    %v2413 = vsub.f32 %v2403, %v2411
    %v2414 = vmul.f32 %v2412, %v2412
    %v2415 = vmul.f32 %v2413, %v2413
    %v2416 = vsel %vm27, %v2414, 0.0
    %2417 = vadd.xlane.f32.xlu0 %v2416
    %v2418 = vpop.xlane.xlu0 %2417
    %v2419 = vsel %vm27, %v2415, 0.0
    %2420 = vadd.xlane.f32.xlu0 %v2419
    %v2421 = vpop.xlane.xlu0 %2420
    %v2422 = vmul.f32 %v2418, %v40
    %v2423 = vmul.f32 %v2421, %v40
    %v2424 = vadd.f32 %v2422, 1e-05
    %v2425 = vadd.f32 %v2423, 1e-05
    %v2426 = vrsqrt.pop %v2424
    %v2427 = vmul.f32 %v2426, %v2424
    %v2428 = vmul.f32 %v2427, %v2426
    %v2429 = vmul.f32 0.5, %v2428
    %v2430 = vsub.f32 1.5, %v2429
    %v2431 = vmul.f32 %v2426, %v2430
    %vm2432 = vweird.f32 %v2424
    %vm2433 = vweird.f32 %v2426
    %vm2434 = vmor %vm2432, %vm2433
    %v2435 = vsel %vm2434, %v2426, %v2431
    %v2436 = vrsqrt.pop %v2425
    %v2437 = vmul.f32 %v2436, %v2425
    %v2438 = vmul.f32 %v2437, %v2436
    %v2439 = vmul.f32 0.5, %v2438
    %v2440 = vsub.f32 1.5, %v2439
    %v2441 = vmul.f32 %v2436, %v2440
    %vm2442 = vweird.f32 %v2425
    %vm2443 = vweird.f32 %v2436
    %vm2444 = vmor %vm2442, %vm2443
    %v2445 = vsel %vm2444, %v2436, %v2441
    %v2446 = vmul.f32 %v2412, %v2435
    %v2447 = vmul.f32 %v2413, %v2445
    %v2448 = vperm.slane %v1326, 3
    %v2449 = vmul.f32 %v2446, %v2448
    %v2450 = vmul.f32 %v2447, %v2448
    %v2451 = vperm.slane %v1326, 4
    %v2452 = vadd.f32 %v2449, %v2451
    %v2453 = vadd.f32 %v2450, %v2451
    %s2454 = scalar_lea.vmem %s4, 32
    %v2455 = vld [vmem:[%s2454] sm:$0xff]
    %v2456 = vld [vmem:[%s2454 + $0x8] sm:$0xff]
    %v2457 = vld [vmem:[%s2454 + $0x10] sm:$0xff]
    %v2458 = vld [vmem:[%s2454 + $0x18] sm:$0xff]
    %v2459 = vperm.slane %v1326, 6
    %v2461 = vsel %vm27, %v2452, 0
    %v2464 = vsel %vm27, %v2453, 0
    %2466 = vmatpush.msra.mxu0 0.0
    %2467 = vmatpush.msra.mxu0 0.0
    %2468 = vmatpush.msra.mxu0 0.0
    %2469 = vmatpush.msra.mxu0 0.0
    %2470 = vmatpush.msra.mxu0 0.0
    %2471 = vmatpush.msra.mxu0 0.0
    %2472 = vmatpush.msra.mxu0 0.0
    %2473 = vmatpush.msra.mxu0 0.0
    %2474 = vmatpush.msra.mxu0 0.0
    %2475 = vmatpush.msra.mxu0 0.0
    %2476 = vmatpush.msra.mxu0 0.0
    %2477 = vmatpush.msra.mxu0 0.0
    %2478 = vmatpush.msra.mxu0 %v2458
    %2479 = vmatpush.msra.mxu0 %v2457
    %2480 = vmatpush.msra.mxu0 %v2456
    %2481 = vmatpush.msra.mxu0 %v2455
    %2482 = vmatmul.f32.gmra.mxu0 %v2461
    %v2483 = vpop.f32.mrf.mxu0
    %v2484 = vadd.f32 %v2459, %v2483
    %2485 = vmatmul.f32.gmra.mxu0 %v2464
    %v2486 = vpop.f32.mrf.mxu0
    %v2487 = vadd.f32 %v2459, %v2486
    %2488 = vdwg.mxu0
    %v2489 = vmul.f32 %v2484, 0.5
    %v2490 = vmul.f32 %v2487, 0.5
    %v2491 = vmul.f32 %v2484, 0.70710677
    %v2492 = vmul.f32 %v2487, 0.70710677
    %v2493 = vmul.f32 %v2491, %v2491
    %v2494 = vmin.f32 16.0, %v2493
    %v2495 = vmul.f32 %v2494, 2.1237322e-06
    %v2496 = vadd.f32 %v2495, 0.00028619796
    %v2497 = vmul.f32 %v2494, %v2496
    %v2498 = vadd.f32 %v2497, 0.0036580483
    %v2499 = vmul.f32 %v2494, %v2498
    %v2500 = vadd.f32 %v2499, 0.05243302
    %v2501 = vmul.f32 %v2494, %v2500
    %v2502 = vadd.f32 %v2501, 0.18741608
    %v2503 = vmul.f32 %v2494, %v2502
    %v2504 = vadd.f32 %v2503, 1.1283791
    %v2505 = vmul.f32 %v2491, %v2504
    %v2506 = vmul.f32 %v2494, 3.8918573e-05
    %v2507 = vadd.f32 %v2506, 0.001143296
    %v2508 = vmul.f32 %v2494, %v2507
    %v2509 = vadd.f32 %v2508, 0.014752088
    %v2510 = vmul.f32 %v2494, %v2509
    %v2511 = vadd.f32 %v2510, 0.112945676
    %v2512 = vmul.f32 %v2494, %v2511
    %v2513 = vadd.f32 %v2512, 0.4994258
    %v2514 = vmul.f32 %v2494, %v2513
    %v2515 = vadd.f32 %v2514, 1.0
    %v2516 = vrcp.pop %v2515
    %v2517 = vmul.f32 %v2515, %v2516
    %v2518 = vsub.f32 1.0, %v2517
    %v2519 = vmul.f32 %v2516, %v2518
    %v2520 = vadd.f32 %v2516, %v2519
    %vm2521 = vweird.f32 %v2515
    %vm2522 = vweird.f32 %v2516
    %vm2523 = vmor %vm2521, %vm2522
    %v2524 = vsel %vm2523, %v2516, %v2520
    %v2525 = vand.u32 2147483647, %v2515
    %vm2526 = vcmp.eq.f32.partialorder %v2525, 8.507059e+37
    %v2527 = vand.u32 %v2515, 2147483648
    %v2528 = vor.u32 1.1754944e-38, %v2527
    %v2529 = vsel %vm2526, %v2528, %v2524
    %v2530 = vmul.f32 %v2505, %v2529
    %v2531 = vmin.f32 %v2530, 1.0
    %v2532 = vmax.f32 %v2531, -1.0
    %v2533 = vmul.f32 %v2492, %v2492
    %v2534 = vmin.f32 16.0, %v2533
    %v2535 = vmul.f32 %v2534, 2.1237322e-06
    %v2536 = vadd.f32 %v2535, 0.00028619796
    %v2537 = vmul.f32 %v2534, %v2536
    %v2538 = vadd.f32 %v2537, 0.0036580483
    %v2539 = vmul.f32 %v2534, %v2538
    %v2540 = vadd.f32 %v2539, 0.05243302
    %v2541 = vmul.f32 %v2534, %v2540
    %v2542 = vadd.f32 %v2541, 0.18741608
    %v2543 = vmul.f32 %v2534, %v2542
    %v2544 = vadd.f32 %v2543, 1.1283791
    %v2545 = vmul.f32 %v2492, %v2544
    %v2546 = vmul.f32 %v2534, 3.8918573e-05
    %v2547 = vadd.f32 %v2546, 0.001143296
    %v2548 = vmul.f32 %v2534, %v2547
    %v2549 = vadd.f32 %v2548, 0.014752088
    %v2550 = vmul.f32 %v2534, %v2549
    %v2551 = vadd.f32 %v2550, 0.112945676
    %v2552 = vmul.f32 %v2534, %v2551
    %v2553 = vadd.f32 %v2552, 0.4994258
    %v2554 = vmul.f32 %v2534, %v2553
    %v2555 = vadd.f32 %v2554, 1.0
    %v2556 = vrcp.pop %v2555
    %v2557 = vmul.f32 %v2555, %v2556
    %v2558 = vsub.f32 1.0, %v2557
    %v2559 = vmul.f32 %v2556, %v2558
    %v2560 = vadd.f32 %v2556, %v2559
    %vm2561 = vweird.f32 %v2555
    %vm2562 = vweird.f32 %v2556
    %vm2563 = vmor %vm2561, %vm2562
    %v2564 = vsel %vm2563, %v2556, %v2560
    %v2565 = vand.u32 2147483647, %v2555
    %vm2566 = vcmp.eq.f32.partialorder %v2565, 8.507059e+37
    %v2567 = vand.u32 %v2555, 2147483648
    %v2568 = vor.u32 1.1754944e-38, %v2567
    %v2569 = vsel %vm2566, %v2568, %v2564
    %v2570 = vmul.f32 %v2545, %v2569
    %v2571 = vmin.f32 %v2570, 1.0
    %v2572 = vmax.f32 %v2571, -1.0
    %v2573 = vadd.f32 %v2532, 1.0
    %v2574 = vadd.f32 %v2572, 1.0
    %v2575 = vmul.f32 %v2489, %v2573
    %v2576 = vmul.f32 %v2490, %v2574
    %s2577 = scalar_lea.vmem %s5, 128
    %v2578 = vld [vmem:[%s2577] sm:$0xff]
    %v2579 = vld [vmem:[%s2577 + $0x8] sm:$0xff]
    %v2580 = vld [vmem:[%s2577 + $0x10] sm:$0xff]
    %v2581 = vld [vmem:[%s2577 + $0x18] sm:$0xff]
    %v2582 = vld [vmem:[%s2577 + $0x20] sm:$0xff]
    %v2583 = vld [vmem:[%s2577 + $0x28] sm:$0xff]
    %v2584 = vld [vmem:[%s2577 + $0x30] sm:$0xff]
    %v2585 = vld [vmem:[%s2577 + $0x38] sm:$0xff]
    %v2586 = vld [vmem:[%s2577 + $0x40] sm:$0xff]
    %v2587 = vld [vmem:[%s2577 + $0x48] sm:$0xff]
    %v2588 = vld [vmem:[%s2577 + $0x50] sm:$0xff]
    %v2589 = vld [vmem:[%s2577 + $0x58] sm:$0xff]
    %v2590 = vld [vmem:[%s2577 + $0x60] sm:$0xff]
    %v2591 = vld [vmem:[%s2577 + $0x68] sm:$0xff]
    %v2592 = vld [vmem:[%s2577 + $0x70] sm:$0xff]
    %v2593 = vld [vmem:[%s2577 + $0x78] sm:$0xff]
    %v2594 = vperm.slane %v1326, 5
    %2595 = vmatpush.msra.mxu0 %v2593
    %2596 = vmatpush.msra.mxu0 %v2592
    %2597 = vmatpush.msra.mxu0 %v2591
    %2598 = vmatpush.msra.mxu0 %v2590
    %2599 = vmatpush.msra.mxu0 %v2589
    %2600 = vmatpush.msra.mxu0 %v2588
    %2601 = vmatpush.msra.mxu0 %v2587
    %2602 = vmatpush.msra.mxu0 %v2586
    %2603 = vmatpush.msra.mxu0 %v2585
    %2604 = vmatpush.msra.mxu0 %v2584
    %2605 = vmatpush.msra.mxu0 %v2583
    %2606 = vmatpush.msra.mxu0 %v2582
    %2607 = vmatpush.msra.mxu0 %v2581
    %2608 = vmatpush.msra.mxu0 %v2580
    %2609 = vmatpush.msra.mxu0 %v2579
    %2610 = vmatpush.msra.mxu0 %v2578
    %2611 = vmatmul.f32.gmra.mxu0 %v2575
    %v2612 = vpop.f32.mrf.mxu0
    %v2613 = vadd.f32 %v2594, %v2612
    %2614 = vmatmul.f32.gmra.mxu0 %v2576
    %v2615 = vpop.f32.mrf.mxu0
    %v2616 = vadd.f32 %v2594, %v2615
    %2617 = vdwg.mxu0
    %v2618 = vadd.f32 %v2402, %v2613
    %v2619 = vadd.f32 %v2403, %v2616
    %2620 = vst.msk [vmem:[#allocation2] sm:$0xff] %vm27, %v2618
    %2621 = vst.msk [vmem:[#allocation2 + $0x8] sm:$0xff] %vm27, %v2619
    // Predicated region
    $region26: #{transformer_forward.1} parent=1 // pred_check
      _
    $region27: #{transformer_forward.1} parent=1 // pred_check_branch
      %2623 = sbr.rel (0) target = $region29
    $region28: #{transformer_forward.1} parent=1 // pred_region
      %2625 = vsyncadd [#allocation3], 0
      %s2626 = sshll.u32 [#allocation2], 4
      %s2627 = int_to_ptr.vmem [resolvable:$true] %s2626
      %s2628 = sshll.u32 %s6, 4
      %s2629 = int_to_ptr.hbm [resolvable:$true] %s2628
      %2634 = dma.vmem_to_hbm [thread:$0]  %s2627, 256, %s2629, [#allocation3], 128, 128, 8
    $region29: #{transformer_forward.1} parent=1 // pred_fallthru
      _
    // Predicated region
    $region30: #{transformer_forward.1} parent=1 // pred_check
      _
    $region31: #{transformer_forward.1} parent=1 // pred_check_branch
      %2636 = sbr.rel (0) target = $region33
    $region32: #{transformer_forward.1} parent=1 // pred_region
      %2638 = dma.done [#allocation3], 256
    $region33: #{transformer_forward.1} parent=1 // pred_fallthru
      _
    %2639 = vsyncpa [#allocation3], 1

</llo_original>
